<compile_context>
chip_gen: v6e
topology: v6e:2x2x1
jax: 0.10.0
libtpu: 0.0.40
codegen_flags: <defaults>
</compile_context>

<pallas_src>
import math
import functools

import jax
import jax.numpy as jnp
from jax.experimental import pallas as pl
from jax.experimental.pallas import tpu as pltpu


# ----------------------------------------------------------------------------
# Fused LinearAttention kernel (one batch element per grid step)
# ----------------------------------------------------------------------------

def _linear_attention_kernel(x_ref, wqkv_ref, wout_ref, bout_ref, g_ref, o_ref, *,
                             heads, dim_head, scale, rms_scale, eps):
    # x_ref:    (1, C, N)  input slab for this batch element
    # wqkv_ref: (3*hid, C) 1x1 conv weight (no bias)
    # wout_ref: (C, hid)   1x1 conv weight of to_out[0]
    # bout_ref: (C, 1)     bias of to_out[0]
    # g_ref:    (C, 1)     RMSNorm gain
    # o_ref:    (1, C, N)
    hid = heads * dim_head

    x = x_ref[0]                                           # (C, N) f32
    x_bf = x.astype(jnp.bfloat16)
    wqkv_bf = wqkv_ref[...].astype(jnp.bfloat16)

    # qkv = W_qkv @ x   (1x1 conv, bias=False)
    qkv = jnp.dot(wqkv_bf, x_bf, preferred_element_type=jnp.float32)   # (3*hid, N)

    n = qkv.shape[-1]
    q = qkv[:hid].reshape(heads, dim_head, n)              # (h, d, N)
    k = qkv[hid:2 * hid].reshape(heads, dim_head, n)       # (h, d, N)
    v = qkv[2 * hid:].reshape(heads, dim_head, n)          # (h, e, N)

    # q.softmax(dim=-2) over dim_head, then * scale   (f32 element-wise)
    q = jnp.exp(q - jnp.max(q, axis=1, keepdims=True))
    q = q * (pl.reciprocal(jnp.sum(q, axis=1, keepdims=True), approx=True) * scale)

    # k.softmax(dim=-1) over the sequence axis
    k = jnp.exp(k - jnp.max(k, axis=2, keepdims=True))
    k = k * pl.reciprocal(jnp.sum(k, axis=2, keepdims=True), approx=True)

    q_bf = q.astype(jnp.bfloat16)
    k_bf = k.astype(jnp.bfloat16)
    v_bf = v.astype(jnp.bfloat16)

    # context^T[h, e, d] = sum_n v[h, e, n] * k[h, d, n]
    context_t = jnp.einsum('hen,hdn->hed', v_bf, k_bf,
                           preferred_element_type=jnp.float32)          # (h, e, d)
    # out[h, e, n] = sum_d context[h, d, e] * q[h, d, n] = context^T @ q
    out = jnp.einsum('hed,hdn->hen', context_t.astype(jnp.bfloat16), q_bf,
                     preferred_element_type=jnp.float32)                # (h, e, N)
    out = out.reshape(hid, n)                                           # 'b h c n -> b (h c) n'

    # to_out[0]: 1x1 conv with bias
    y = jnp.dot(wout_ref[...].astype(jnp.bfloat16), out.astype(jnp.bfloat16),
                preferred_element_type=jnp.float32) + bout_ref[...]     # (C, N)

    # to_out[1]: RMSNorm  ==  F.normalize(y, dim=1) * g * sqrt(C)
    nrm = jnp.sqrt(jnp.sum(y * y, axis=0, keepdims=True))               # (1, N)
    inv = pl.reciprocal(jnp.maximum(nrm, eps), approx=True)
    o_ref[0] = y * inv * g_ref[...] * rms_scale


def linear_attention(x, params, *, heads=4, dim_head=32):
    """x: (B, C, N) float32. Returns (B, C, N) float32 (== LinearAttention.forward)."""
    B, C, N = x.shape
    hid = heads * dim_head

    kern = functools.partial(
        _linear_attention_kernel,
        heads=heads,
        dim_head=dim_head,
        scale=float(dim_head) ** -0.5,
        rms_scale=float(C) ** 0.5,
        eps=1e-12,
    )

    return pl.pallas_call(
        kern,
        out_shape=jax.ShapeDtypeStruct((B, C, N), jnp.float32),
        grid=(B,),
        in_specs=[
            pl.BlockSpec((1, C, N), lambda b: (b, 0, 0)),        # x slab
            pl.BlockSpec((3 * hid, C), lambda b: (0, 0)),        # qkv weight
            pl.BlockSpec((C, hid), lambda b: (0, 0)),            # out-proj weight
            pl.BlockSpec((C, 1), lambda b: (0, 0)),              # out-proj bias
            pl.BlockSpec((C, 1), lambda b: (0, 0)),              # RMSNorm g
        ],
        out_specs=pl.BlockSpec((1, C, N), lambda b: (b, 0, 0)),
        compiler_params=pltpu.CompilerParams(
            dimension_semantics=("parallel",),                    # 2x on v7x (2 TCs)
        ),
    )(x, params["w_qkv"], params["w_out"],
      params["b_out"].reshape(C, 1), params["g"].reshape(C, 1))


# ----------------------------------------------------------------------------
# Pure-JAX f32 reference (mirrors the PyTorch module exactly)
# ----------------------------------------------------------------------------

def linear_attention_ref(x, params, heads, dim_head):
    B, C, N = x.shape
    hid = heads * dim_head
    qkv = jnp.einsum('oc,bcn->bon', params["w_qkv"], x)
    q, k, v = jnp.split(qkv, 3, axis=1)
    q = q.reshape(B, heads, dim_head, N)
    k = k.reshape(B, heads, dim_head, N)
    v = v.reshape(B, heads, dim_head, N)
    q = jax.nn.softmax(q, axis=-2) * (float(dim_head) ** -0.5)
    k = jax.nn.softmax(k, axis=-1)
    context = jnp.einsum('bhdn,bhen->bhde', k, v)
    out = jnp.einsum('bhde,bhdn->bhen', context, q)
    out = out.reshape(B, hid, N)
    y = jnp.einsum('oc,bcn->bon', params["w_out"], out) + params["b_out"][None, :, None]
    nrm = jnp.sqrt(jnp.sum(y * y, axis=1, keepdims=True))
    return y / jnp.maximum(nrm, 1e-12) * params["g"][None, :, None] * (float(C) ** 0.5)


# ----------------------------------------------------------------------------
# Main
# ----------------------------------------------------------------------------

if __name__ == "__main__":
    B, dim, N = 2, 64, 128                 # (batch, channels, sequence length)
    heads, dim_head = 4, 32                # module defaults; hidden_dim = 128
    hid = heads * dim_head

    key = jax.random.PRNGKey(0)
    k1, k2, k3, k4 = jax.random.split(key, 4)
    params = {
        "w_qkv": (1.0 / math.sqrt(dim)) * jax.random.normal(k1, (3 * hid, dim), jnp.float32),
        "w_out": (1.0 / math.sqrt(hid)) * jax.random.normal(k2, (dim, hid), jnp.float32),
        "b_out": 0.1 * jax.random.normal(k3, (dim,), jnp.float32),
        "g": jnp.ones((dim,), jnp.float32),               # RMSNorm init
    }
    x = jax.random.normal(k4, (B, dim, N), jnp.float32)

    fwd = jax.jit(functools.partial(linear_attention, heads=heads, dim_head=dim_head))
    out = jax.block_until_ready(fwd(x, params))

    ref = linear_attention_ref(x, params, heads, dim_head)

    assert out.shape == (B, dim, N), out.shape
    assert bool(jnp.all(jnp.isfinite(out)))
    max_err = float(jnp.max(jnp.abs(out - ref)))
    assert jnp.allclose(out, ref, atol=5e-2, rtol=5e-2), f"max abs err {max_err}"
    print("KERNEL_OK")
</pallas_src>

<mosaic_0001>
module attributes {stable_mosaic.version = 11 : i64} {
  func.func @_linear_attention_kernel(%arg0: i32, %arg1: memref<1x64x128xf32, #tpu.memory_space<vmem>>, %arg2: memref<384x64xf32, #tpu.memory_space<vmem>>, %arg3: memref<64x128xf32, #tpu.memory_space<vmem>>, %arg4: memref<64x1xf32, #tpu.memory_space<vmem>>, %arg5: memref<64x1xf32, #tpu.memory_space<vmem>>, %arg6: memref<1x64x128xf32, #tpu.memory_space<vmem>>) attributes {dimension_semantics = [#tpu.dimension_semantics<parallel>], iteration_bounds = array<i64: 2>, scalar_prefetch = 0 : i64, scratch_operands = 0 : i64, tpu.core_type = #tpu.core_type<tc>, window_params = [{transform_indices = @transform_0, window_bounds = array<i64: 1, 64, 128>}, {pipeline_mode = #tpu.pipeline_mode<synchronous>, transform_indices = @transform_1, window_bounds = array<i64: 384, 64>}, {pipeline_mode = #tpu.pipeline_mode<synchronous>, transform_indices = @transform_2, window_bounds = array<i64: 64, 128>}, {pipeline_mode = #tpu.pipeline_mode<synchronous>, transform_indices = @transform_3, window_bounds = array<i64: 64, 1>}, {pipeline_mode = #tpu.pipeline_mode<synchronous>, transform_indices = @transform_4, window_bounds = array<i64: 64, 1>}, {transform_indices = @transform_5, window_bounds = array<i64: 1, 64, 128>}]} {
    %c0 = arith.constant 0 : index
    %c0_0 = arith.constant 0 : index
    %c0_1 = arith.constant 0 : index
    %0 = vector.load %arg1[%c0, %c0_0, %c0_1] : memref<1x64x128xf32, #tpu.memory_space<vmem>>, vector<1x64x128xf32>
    %1 = vector.shape_cast %0 : vector<1x64x128xf32> to vector<64x128xf32>
    %2 = arith.truncf %1 : vector<64x128xf32> to vector<64x128xbf16>
    %c0_2 = arith.constant 0 : index
    %c0_3 = arith.constant 0 : index
    %3 = vector.load %arg2[%c0_2, %c0_3] : memref<384x64xf32, #tpu.memory_space<vmem>>, vector<384x64xf32>
    %4 = arith.truncf %3 : vector<384x64xf32> to vector<384x64xbf16>
    %cst = arith.constant dense<0.000000e+00> : vector<384x128xf32>
    %5 = tpu.matmul %4, %2, %cst {dimension_numbers = #tpu.dot_dimension_numbers<[1], [0], [0], [1], [0, 0, 1, 1], [], []>} : vector<384x64xbf16>, vector<64x128xbf16>, vector<384x128xf32> -> vector<384x128xf32>
    %6 = vector.extract_strided_slice %5 {offsets = [0, 0], sizes = [128, 128], strides = [1, 1]} : vector<384x128xf32> to vector<128x128xf32>
    %7 = vector.shape_cast %6 : vector<128x128xf32> to vector<4x32x128xf32>
    %8 = vector.extract_strided_slice %5 {offsets = [128, 0], sizes = [128, 128], strides = [1, 1]} : vector<384x128xf32> to vector<128x128xf32>
    %9 = vector.shape_cast %8 : vector<128x128xf32> to vector<4x32x128xf32>
    %10 = vector.extract_strided_slice %5 {offsets = [256, 0], sizes = [128, 128], strides = [1, 1]} : vector<384x128xf32> to vector<128x128xf32>
    %11 = vector.shape_cast %10 : vector<128x128xf32> to vector<4x32x128xf32>
    %cst_4 = arith.constant dense<0xFF800000> : vector<4x128xf32>
    %12 = vector.multi_reduction <maximumf>, %7, %cst_4 [1] : vector<4x32x128xf32> to vector<4x128xf32>
    %13 = vector.shape_cast %12 : vector<4x128xf32> to vector<4x1x128xf32>
    %14 = vector.broadcast %13 : vector<4x1x128xf32> to vector<4x32x128xf32>
    %15 = arith.subf %7, %14 : vector<4x32x128xf32>
    %16 = math.exp %15 : vector<4x32x128xf32>
    %cst_5 = arith.constant dense<0.000000e+00> : vector<4x128xf32>
    %17 = vector.multi_reduction <add>, %16, %cst_5 [1] : vector<4x32x128xf32> to vector<4x128xf32>
    %18 = vector.shape_cast %17 : vector<4x128xf32> to vector<4x1x128xf32>
    %19 = tpu.reciprocal %18 {approx = true} : vector<4x1x128xf32> -> vector<4x1x128xf32>
    %cst_6 = arith.constant 0.176776692 : f32
    %20 = vector.broadcast %cst_6 : f32 to vector<4x1x128xf32>
    %21 = arith.mulf %19, %20 : vector<4x1x128xf32>
    %22 = vector.broadcast %21 : vector<4x1x128xf32> to vector<4x32x128xf32>
    %23 = arith.mulf %16, %22 : vector<4x32x128xf32>
    %cst_7 = arith.constant dense<0xFF800000> : vector<4x32xf32>
    %24 = vector.multi_reduction <maximumf>, %9, %cst_7 [2] : vector<4x32x128xf32> to vector<4x32xf32>
    %25 = vector.shape_cast %24 : vector<4x32xf32> to vector<4x32x1xf32>
    %26 = vector.broadcast %25 : vector<4x32x1xf32> to vector<4x32x128xf32>
    %27 = arith.subf %9, %26 : vector<4x32x128xf32>
    %28 = math.exp %27 : vector<4x32x128xf32>
    %cst_8 = arith.constant dense<0.000000e+00> : vector<4x32xf32>
    %29 = vector.multi_reduction <add>, %28, %cst_8 [2] : vector<4x32x128xf32> to vector<4x32xf32>
    %30 = vector.shape_cast %29 : vector<4x32xf32> to vector<4x32x1xf32>
    %31 = tpu.reciprocal %30 {approx = true} : vector<4x32x1xf32> -> vector<4x32x1xf32>
    %32 = vector.broadcast %31 : vector<4x32x1xf32> to vector<4x32x128xf32>
    %33 = arith.mulf %28, %32 : vector<4x32x128xf32>
    %34 = arith.truncf %23 : vector<4x32x128xf32> to vector<4x32x128xbf16>
    %35 = arith.truncf %33 : vector<4x32x128xf32> to vector<4x32x128xbf16>
    %36 = arith.truncf %11 : vector<4x32x128xf32> to vector<4x32x128xbf16>
    "tpu.trace_start"() <{level = 10 : i32, message = "hen,hdn->hed"}> : () -> ()
    %cst_9 = arith.constant dense<0.000000e+00> : vector<4x32x32xf32>
    %37 = tpu.matmul %36, %35, %cst_9 {dimension_numbers = #tpu.dot_dimension_numbers<[2], [2], [1], [1], [0, 0, 0, 1, 1, 1], [0], [0]>} : vector<4x32x128xbf16>, vector<4x32x128xbf16>, vector<4x32x32xf32> -> vector<4x32x32xf32>
    "tpu.trace_stop"() : () -> ()
    %38 = arith.truncf %37 : vector<4x32x32xf32> to vector<4x32x32xbf16>
    "tpu.trace_start"() <{level = 10 : i32, message = "hed,hdn->hen"}> : () -> ()
    %cst_10 = arith.constant dense<0.000000e+00> : vector<4x32x128xf32>
    %39 = tpu.matmul %38, %34, %cst_10 {dimension_numbers = #tpu.dot_dimension_numbers<[2], [1], [1], [2], [0, 0, 0, 1, 1, 2], [0], [0]>} : vector<4x32x32xbf16>, vector<4x32x128xbf16>, vector<4x32x128xf32> -> vector<4x32x128xf32>
    "tpu.trace_stop"() : () -> ()
    %40 = vector.shape_cast %39 : vector<4x32x128xf32> to vector<128x128xf32>
    %c0_11 = arith.constant 0 : index
    %c0_12 = arith.constant 0 : index
    %41 = vector.load %arg3[%c0_11, %c0_12] : memref<64x128xf32, #tpu.memory_space<vmem>>, vector<64x128xf32>
    %42 = arith.truncf %41 : vector<64x128xf32> to vector<64x128xbf16>
    %43 = arith.truncf %40 : vector<128x128xf32> to vector<128x128xbf16>
    %cst_13 = arith.constant dense<0.000000e+00> : vector<64x128xf32>
    %44 = tpu.matmul %42, %43, %cst_13 {dimension_numbers = #tpu.dot_dimension_numbers<[1], [0], [0], [1], [0, 0, 1, 1], [], []>} : vector<64x128xbf16>, vector<128x128xbf16>, vector<64x128xf32> -> vector<64x128xf32>
    %c0_14 = arith.constant 0 : index
    %c0_15 = arith.constant 0 : index
    %45 = vector.load %arg4[%c0_14, %c0_15] : memref<64x1xf32, #tpu.memory_space<vmem>>, vector<64x1xf32>
    %46 = vector.broadcast %45 : vector<64x1xf32> to vector<64x128xf32>
    %47 = arith.addf %44, %46 : vector<64x128xf32>
    %48 = arith.mulf %47, %47 : vector<64x128xf32>
    %cst_16 = arith.constant dense<0.000000e+00> : vector<128xf32>
    %49 = vector.multi_reduction <add>, %48, %cst_16 [0] : vector<64x128xf32> to vector<128xf32>
    %50 = vector.shape_cast %49 : vector<128xf32> to vector<1x128xf32>
    %51 = math.sqrt %50 : vector<1x128xf32>
    %cst_17 = arith.constant 9.99999996E-13 : f32
    %52 = vector.broadcast %cst_17 : f32 to vector<1x128xf32>
    %53 = arith.maximumf %51, %52 : vector<1x128xf32>
    %54 = tpu.reciprocal %53 {approx = true} : vector<1x128xf32> -> vector<1x128xf32>
    %55 = vector.broadcast %54 : vector<1x128xf32> to vector<64x128xf32>
    %56 = arith.mulf %47, %55 : vector<64x128xf32>
    %c0_18 = arith.constant 0 : index
    %c0_19 = arith.constant 0 : index
    %57 = vector.load %arg5[%c0_18, %c0_19] : memref<64x1xf32, #tpu.memory_space<vmem>>, vector<64x1xf32>
    %58 = vector.broadcast %57 : vector<64x1xf32> to vector<64x128xf32>
    %59 = arith.mulf %56, %58 : vector<64x128xf32>
    %cst_20 = arith.constant 8.000000e+00 : f32
    %60 = vector.broadcast %cst_20 : f32 to vector<64x128xf32>
    %61 = arith.mulf %59, %60 : vector<64x128xf32>
    %c0_21 = arith.constant 0 : index
    %c0_22 = arith.constant 0 : index
    %c0_23 = arith.constant 0 : index
    %62 = vector.load %arg6[%c0_21, %c0_22, %c0_23] : memref<1x64x128xf32, #tpu.memory_space<vmem>>, vector<1x64x128xf32>
    %63 = vector.shape_cast %62 : vector<1x64x128xf32> to vector<64x128xf32>
    %64 = vector.shape_cast %61 : vector<64x128xf32> to vector<1x64x128xf32>
    tpu.vector_store %arg6[%c0_21, %c0_22, %c0_23], %64 {strides = array<i32>} : memref<1x64x128xf32, #tpu.memory_space<vmem>>, vector<1x64x128xf32>,
    return
  }
  func.func @transform_0(%arg0: i32) -> (i32, i32, i32) {
    %c0_i32 = arith.constant 0 : i32
    %c0_i32_0 = arith.constant 0 : i32
    %c0_i32_1 = arith.constant 0 : i32
    return %arg0, %c0_i32, %c0_i32_0 : i32, i32, i32
  }
  func.func @transform_1(%arg0: i32) -> (i32, i32) {
    %c0_i32 = arith.constant 0 : i32
    %c0_i32_0 = arith.constant 0 : i32
    %c0_i32_1 = arith.constant 0 : i32
    return %c0_i32, %c0_i32_0 : i32, i32
  }
  func.func @transform_2(%arg0: i32) -> (i32, i32) {
    %c0_i32 = arith.constant 0 : i32
    %c0_i32_0 = arith.constant 0 : i32
    %c0_i32_1 = arith.constant 0 : i32
    return %c0_i32, %c0_i32_0 : i32, i32
  }
  func.func @transform_3(%arg0: i32) -> (i32, i32) {
    %c0_i32 = arith.constant 0 : i32
    %c0_i32_0 = arith.constant 0 : i32
    %c0_i32_1 = arith.constant 0 : i32
    return %c0_i32, %c0_i32_0 : i32, i32
  }
  func.func @transform_4(%arg0: i32) -> (i32, i32) {
    %c0_i32 = arith.constant 0 : i32
    %c0_i32_0 = arith.constant 0 : i32
    %c0_i32_1 = arith.constant 0 : i32
    return %c0_i32, %c0_i32_0 : i32, i32
  }
  func.func @transform_5(%arg0: i32) -> (i32, i32, i32) {
    %c0_i32 = arith.constant 0 : i32
    %c0_i32_0 = arith.constant 0 : i32
    %c0_i32_1 = arith.constant 0 : i32
    return %arg0, %c0_i32, %c0_i32_0 : i32, i32, i32
  }
}

</mosaic_0001>

<llo_original>
// kernel: linear_attention.1
$region0: #{linear_attention.1}
  #allocation0 [shape = 'u32[]', space=smem, size = 0x4, offset = 0x4, fixed_abs, tag = 'smem constant byte address 0x4 - core index']
  #allocation1 [shape = 'u32[144,128]{1,0:T(1,128)}', space=vmem, size = 0x12000, scoped, tag = 'internal scratch']
  %s0 = inlined_call_operand.vmem [shape: f32[2,64,128], index: 0, kind: input, shape index: {}]
  %s1 = inlined_call_operand.vmem [shape: f32[384,64], index: 1, kind: input, shape index: {}]
  %s2 = inlined_call_operand.vmem [shape: f32[64,128], index: 2, kind: input, shape index: {}]
  %s3 = inlined_call_operand.vmem [shape: f32[64,1], index: 3, kind: input, shape index: {}]
  %s4 = inlined_call_operand.vmem [shape: f32[64,1], index: 4, kind: input, shape index: {}]
  %s5 = inlined_call_operand.hbm [shape: f32[2,64,128], index: 5, kind: output, shape index: {}]
  %s6 = sld [smem:[#allocation0]]
  $region53: #{linear_attention.1} parent=0
    _
  %s8 = ssub.s32 1, %s6
  %s9 = scalar_select 0, %s8, %s6
  $region1: #{linear_attention.1} parent=0
    #allocation2 [shape = 'u8[65536]{0}', space=vmem, size = 0x10000, scoped, tag = 'output window, operand 0']
    #allocation3 [shape = 's32[2]{0}', space=sflag, size = 0x8, scoped, tag = 'scoped memory for linear_attention.1']
    %10 = vsyncpa [#allocation3], 0
    %s11 = scalar_lea.sflag [#allocation3], 1
    %12 = vsyncpa %s11, 0
    loop: start=0, step=1, limit=4
    $region2: #{linear_attention.1} parent=1 // loop_pre_header
      _
    $region3: #{linear_attention.1} parent=1 // loop_header
      %s14 = sphi 0, %s18
      %p15 = scmp.ge.s32.totalorder %s14, 4
      %s24 = sphi 0, %s26
      %s27 = sphi 0, %s24
      %s28 = sphi 0, %s27
      %s44 = sphi 0, %s28
      %s48 = sphi 0, %s48
      %s50 = sphi 0, %s48
      %s51 = sphi 0, %s50
      %s65 = sphi 0, %s51
      %s69 = sphi 0, %s69
      %s71 = sphi 0, %s69
      %s72 = sphi 0, %s71
      %s86 = sphi 0, %s72
      %s90 = sphi 0, %s90
      %s92 = sphi 0, %s90
      %s93 = sphi 0, %s92
      %s107 = sphi 0, %s93
      %s111 = sphi 0, %s111
      %s113 = sphi 0, %s111
      %s114 = sphi 0, %s113
      %s128 = sphi 0, %s114
      %s134 = sphi 0, %s136
      %s137 = sphi 0, %s134
      %s138 = sphi 0, %s137
      %s154 = sphi 0, %s138
    $region4: #{linear_attention.1} parent=1 // loop_header_branch
      %17 = sbr.rel (%p15) target = $region8
    $region5: #{linear_attention.1} parent=1 // loop_body
      %s19 = ssub.s32 %s14, 1
      %s20 = ssub.s32 %s14, 2
      %s21 = sadd.s32 %s14, 1
      %s22 = ssub.s32 %s14, %s21
      %p23 = scmp.eq.s32.totalorder %s22, 0
      %s25 = sadd.s32 %s24, 1
      %s26 = scalar_select %p23, %s24, %s25
      %p29 = pneg %p23
      %p30 = scmp.eq.s32.totalorder %s14, 1
      %p31 = por %p29, %p30
      %p32 = scmp.ne.s32.totalorder %s24, %s27
      %p33 = scmp.eq.s32.totalorder %s14, 0
      %p34 = por %p32, %p33
      %p35 = scmp.ne.s32.totalorder %s24, %s27
      %p36 = scmp.eq.s32.totalorder %s19, 1
      %p37 = por %p35, %p36
      %p38 = scmp.ne.s32.totalorder %s27, %s28
      %p39 = scmp.eq.s32.totalorder %s19, 0
      %p40 = por %p38, %p39
      %p41 = scmp.ne.s32.totalorder %s27, %s28
      %p42 = scmp.eq.s32.totalorder %s20, 1
      %p43 = por %p41, %p42
      %p45 = scmp.ne.s32.totalorder %s28, %s44
      %p46 = scmp.eq.s32.totalorder %s20, 0
      %p47 = por %p45, %p46
      %s49 = sadd.s32 %s48, 1
      %p52 = scmp.eq.s32.totalorder %s14, 1
      %p53 = scmp.ne.s32.totalorder %s48, %s50
      %p54 = scmp.eq.s32.totalorder %s14, 0
      %p55 = por %p53, %p54
      %p56 = scmp.ne.s32.totalorder %s48, %s50
      %p57 = scmp.eq.s32.totalorder %s19, 1
      %p58 = por %p56, %p57
      %p59 = scmp.ne.s32.totalorder %s50, %s51
      %p60 = scmp.eq.s32.totalorder %s19, 0
      %p61 = por %p59, %p60
      %p62 = scmp.ne.s32.totalorder %s50, %s51
      %p63 = scmp.eq.s32.totalorder %s20, 1
      %p64 = por %p62, %p63
      %p66 = scmp.ne.s32.totalorder %s51, %s65
      %p67 = scmp.eq.s32.totalorder %s20, 0
      %p68 = por %p66, %p67
      %s70 = sadd.s32 %s69, 1
      %p73 = scmp.eq.s32.totalorder %s14, 1
      %p74 = scmp.ne.s32.totalorder %s69, %s71
      %p75 = scmp.eq.s32.totalorder %s14, 0
      %p76 = por %p74, %p75
      %p77 = scmp.ne.s32.totalorder %s69, %s71
      %p78 = scmp.eq.s32.totalorder %s19, 1
      %p79 = por %p77, %p78
      %p80 = scmp.ne.s32.totalorder %s71, %s72
      %p81 = scmp.eq.s32.totalorder %s19, 0
      %p82 = por %p80, %p81
      %p83 = scmp.ne.s32.totalorder %s71, %s72
      %p84 = scmp.eq.s32.totalorder %s20, 1
      %p85 = por %p83, %p84
      %p87 = scmp.ne.s32.totalorder %s72, %s86
      %p88 = scmp.eq.s32.totalorder %s20, 0
      %p89 = por %p87, %p88
      %s91 = sadd.s32 %s90, 1
      %p94 = scmp.eq.s32.totalorder %s14, 1
      %p95 = scmp.ne.s32.totalorder %s90, %s92
      %p96 = scmp.eq.s32.totalorder %s14, 0
      %p97 = por %p95, %p96
      %p98 = scmp.ne.s32.totalorder %s90, %s92
      %p99 = scmp.eq.s32.totalorder %s19, 1
      %p100 = por %p98, %p99
      %p101 = scmp.ne.s32.totalorder %s92, %s93
      %p102 = scmp.eq.s32.totalorder %s19, 0
      %p103 = por %p101, %p102
      %p104 = scmp.ne.s32.totalorder %s92, %s93
      %p105 = scmp.eq.s32.totalorder %s20, 1
      %p106 = por %p104, %p105
      %p108 = scmp.ne.s32.totalorder %s93, %s107
      %p109 = scmp.eq.s32.totalorder %s20, 0
      %p110 = por %p108, %p109
      %s112 = sadd.s32 %s111, 1
      %p115 = scmp.eq.s32.totalorder %s14, 1
      %p116 = scmp.ne.s32.totalorder %s111, %s113
      %p117 = scmp.eq.s32.totalorder %s14, 0
      %p118 = por %p116, %p117
      %p119 = scmp.ne.s32.totalorder %s111, %s113
      %p120 = scmp.eq.s32.totalorder %s19, 1
      %p121 = por %p119, %p120
      %p122 = scmp.ne.s32.totalorder %s113, %s114
      %p123 = scmp.eq.s32.totalorder %s19, 0
      %p124 = por %p122, %p123
      %p125 = scmp.ne.s32.totalorder %s113, %s114
      %p126 = scmp.eq.s32.totalorder %s20, 1
      %p127 = por %p125, %p126
      %p129 = scmp.ne.s32.totalorder %s114, %s128
      %p130 = scmp.eq.s32.totalorder %s20, 0
      %p131 = por %p129, %p130
      %s132 = ssub.s32 %s14, %s21
      %p133 = scmp.eq.s32.totalorder %s132, 0
      %s135 = sadd.s32 %s134, 1
      %s136 = scalar_select %p133, %s134, %s135
      %p139 = pneg %p133
      %p140 = scmp.eq.s32.totalorder %s14, 1
      %p141 = por %p139, %p140
      %p142 = scmp.ne.s32.totalorder %s134, %s137
      %p143 = scmp.eq.s32.totalorder %s14, 0
      %p144 = por %p142, %p143
      %p145 = scmp.ne.s32.totalorder %s134, %s137
      %p146 = scmp.eq.s32.totalorder %s19, 1
      %p147 = por %p145, %p146
      %p148 = scmp.ne.s32.totalorder %s137, %s138
      %p149 = scmp.eq.s32.totalorder %s19, 0
      %p150 = por %p148, %p149
      %p151 = scmp.ne.s32.totalorder %s137, %s138
      %p152 = scmp.eq.s32.totalorder %s20, 1
      %p153 = por %p151, %p152
      %p155 = scmp.ne.s32.totalorder %s138, %s154
      %p156 = scmp.eq.s32.totalorder %s20, 0
      %p157 = por %p155, %p156
      %p158 = scmp.le.s32.totalorder 1, %s14
      %p159 = scmp.lt.s32.totalorder %s14, 3
      %p160 = pnand %p158, %p159
      %p161 = pneg %p160
      // Predicated region
      $region9: #{linear_attention.1} parent=5 // pred_check
        _
      $region10: #{linear_attention.1} parent=5 // pred_check_branch
        %163 = sbr.rel (%p160) target = $region12
      $region11: #{linear_attention.1} parent=5 // pred_region
        %s164 = ssub.s32 %s14, 1
        // Predicated region
        $region13: #{linear_attention.1} parent=11 // pred_check
          %p165 = pneg %p61
        $region14: #{linear_attention.1} parent=11 // pred_check_branch
          %167 = sbr.rel (%p165) target = $region16
        $region15: #{linear_attention.1} parent=11 // pred_region
          _
        $region16: #{linear_attention.1} parent=11 // pred_fallthru
          _
        // Predicated region
        $region17: #{linear_attention.1} parent=11 // pred_check
          %p168 = pneg %p82
        $region18: #{linear_attention.1} parent=11 // pred_check_branch
          %170 = sbr.rel (%p168) target = $region20
        $region19: #{linear_attention.1} parent=11 // pred_region
          _
        $region20: #{linear_attention.1} parent=11 // pred_fallthru
          _
        // Predicated region
        $region21: #{linear_attention.1} parent=11 // pred_check
          %p171 = pneg %p103
        $region22: #{linear_attention.1} parent=11 // pred_check_branch
          %173 = sbr.rel (%p171) target = $region24
        $region23: #{linear_attention.1} parent=11 // pred_region
          _
        $region24: #{linear_attention.1} parent=11 // pred_fallthru
          _
        // Predicated region
        $region25: #{linear_attention.1} parent=11 // pred_check
          %p174 = pneg %p124
        $region26: #{linear_attention.1} parent=11 // pred_check_branch
          %176 = sbr.rel (%p174) target = $region28
        $region27: #{linear_attention.1} parent=11 // pred_region
          _
        $region28: #{linear_attention.1} parent=11 // pred_fallthru
          _
      $region12: #{linear_attention.1} parent=5 // pred_fallthru
        _
      %p177 = scmp.lt.s32.totalorder %s14, 2
      // Predicated region
      $region29: #{linear_attention.1} parent=5 // pred_check
        %p178 = pneg %p177
      $region30: #{linear_attention.1} parent=5 // pred_check_branch
        %180 = sbr.rel (%p178) target = $region32
      $region31: #{linear_attention.1} parent=5 // pred_region
        // Predicated region
        $region33: #{linear_attention.1} parent=31 // pred_check
          %p181 = pneg %p34
        $region34: #{linear_attention.1} parent=31 // pred_check_branch
          %183 = sbr.rel (%p181) target = $region36
        $region35: #{linear_attention.1} parent=31 // pred_region
          %p184 = scmp.lt.s32.totalorder %s14, 1
          %s185 = scalar_select %p184, %s14, 1
          %s186 = smul.addr %s185, 8
          %s187 = smul.addr %s186, 8
          %s188 = scalar_lea.vmem %s0, %s187
        $region36: #{linear_attention.1} parent=31 // pred_fallthru
          _
      $region32: #{linear_attention.1} parent=5 // pred_fallthru
        _
      %p189 = scmp.le.s32.totalorder 1, %s14
      %p190 = scmp.lt.s32.totalorder %s14, 3
      %p191 = pnand %p189, %p190
      %p192 = pneg %p191
      // Predicated region
      $region37: #{linear_attention.1} parent=5 // pred_check
        _
      $region38: #{linear_attention.1} parent=5 // pred_check_branch
        %194 = sbr.rel (%p191) target = $region40
      $region39: #{linear_attention.1} parent=5 // pred_region
        %s195 = ssub.s32 %s14, 1
        %p196 = scmp.lt.s32.totalorder %s19, 1
        %s197 = scalar_select %p196, %s19, 1
        %s198 = smul.addr %s197, 8
        %s199 = smul.addr %s198, 8
        %s200 = scalar_lea.vmem %s0, %s199
        %p201 = pneg %p40
        %p202 = pneg %p37
        %p203 = pneg %p61
        %p204 = pneg %p58
        %p205 = pneg %p82
        %p206 = pneg %p79
        %p207 = pneg %p103
        %p208 = pneg %p100
        %p209 = pneg %p124
        %p210 = pneg %p121
        %p211 = pneg %p150
        %p212 = pneg %p147
        %s213 = sand.u32 %s137, 1
        %s214 = scalar_lea.sflag [#allocation3], %s213
        %s215 = sand.u32 %s137, 1
        %s216 = smul.addr %s215, 64
        %s217 = scalar_lea.vmem [#allocation2], %s216
        %p218 = scmp.lt.s32.totalorder %s19, 1
        %s219 = scalar_select %p218, %s19, 1
        %s220 = smul.addr %s219, 8
        %s221 = smul.addr %s220, 8
        %s222 = scalar_lea.vmem %s0, %s221
        %v224 = vld [vmem:[%s222] sm:$0xff]
        %v225 = vld [vmem:[%s222 + $0x8] sm:$0xff]
        %v226 = vld [vmem:[%s222 + $0x10] sm:$0xff]
        %v227 = vld [vmem:[%s222 + $0x18] sm:$0xff]
        %v228 = vld [vmem:[%s222 + $0x20] sm:$0xff]
        %v229 = vld [vmem:[%s222 + $0x28] sm:$0xff]
        %v230 = vld [vmem:[%s222 + $0x30] sm:$0xff]
        %v231 = vld [vmem:[%s222 + $0x38] sm:$0xff]
        %v232 = vpack.c.bf16 %v225, %v224
        %v233 = vpack.c.bf16 %v227, %v226
        %v234 = vpack.c.bf16 %v229, %v228
        %v235 = vpack.c.bf16 %v231, %v230
        %v236 = vld [vmem:[%s1] sm:$0xff]
        %v237 = vld [vmem:[%s1 + $0x8] sm:$0xff]
        %v238 = vld [vmem:[%s1 + $0x10] sm:$0xff]
        %v239 = vld [vmem:[%s1 + $0x18] sm:$0xff]
        %v240 = vld [vmem:[%s1 + $0x20] sm:$0xff]
        %v241 = vld [vmem:[%s1 + $0x28] sm:$0xff]
        %v242 = vld [vmem:[%s1 + $0x30] sm:$0xff]
        %v243 = vld [vmem:[%s1 + $0x38] sm:$0xff]
        %v244 = vld [vmem:[%s1 + $0x40] sm:$0xff]
        %v245 = vld [vmem:[%s1 + $0x48] sm:$0xff]
        %v246 = vld [vmem:[%s1 + $0x50] sm:$0xff]
        %v247 = vld [vmem:[%s1 + $0x58] sm:$0xff]
        %v248 = vld [vmem:[%s1 + $0x60] sm:$0xff]
        %v249 = vld [vmem:[%s1 + $0x68] sm:$0xff]
        %v250 = vld [vmem:[%s1 + $0x70] sm:$0xff]
        %v251 = vld [vmem:[%s1 + $0x78] sm:$0xff]
        %v252 = vld [vmem:[%s1 + $0x80] sm:$0xff]
        %v253 = vld [vmem:[%s1 + $0x88] sm:$0xff]
        %v254 = vld [vmem:[%s1 + $0x90] sm:$0xff]
        %v255 = vld [vmem:[%s1 + $0x98] sm:$0xff]
        %v256 = vld [vmem:[%s1 + $0xa0] sm:$0xff]
        %v257 = vld [vmem:[%s1 + $0xa8] sm:$0xff]
        %v258 = vld [vmem:[%s1 + $0xb0] sm:$0xff]
        %v259 = vld [vmem:[%s1 + $0xb8] sm:$0xff]
        %v260 = vld [vmem:[%s1 + $0xc0] sm:$0xff]
        %v261 = vld [vmem:[%s1 + $0xc8] sm:$0xff]
        %v262 = vld [vmem:[%s1 + $0xd0] sm:$0xff]
        %v263 = vld [vmem:[%s1 + $0xd8] sm:$0xff]
        %v264 = vld [vmem:[%s1 + $0xe0] sm:$0xff]
        %v265 = vld [vmem:[%s1 + $0xe8] sm:$0xff]
        %v266 = vld [vmem:[%s1 + $0xf0] sm:$0xff]
        %v267 = vld [vmem:[%s1 + $0xf8] sm:$0xff]
        %v268 = vld [vmem:[%s1 + $0x100] sm:$0xff]
        %v269 = vld [vmem:[%s1 + $0x108] sm:$0xff]
        %v270 = vld [vmem:[%s1 + $0x110] sm:$0xff]
        %v271 = vld [vmem:[%s1 + $0x118] sm:$0xff]
        %v272 = vld [vmem:[%s1 + $0x120] sm:$0xff]
        %v273 = vld [vmem:[%s1 + $0x128] sm:$0xff]
        %v274 = vld [vmem:[%s1 + $0x130] sm:$0xff]
        %v275 = vld [vmem:[%s1 + $0x138] sm:$0xff]
        %v276 = vld [vmem:[%s1 + $0x140] sm:$0xff]
        %v277 = vld [vmem:[%s1 + $0x148] sm:$0xff]
        %v278 = vld [vmem:[%s1 + $0x150] sm:$0xff]
        %v279 = vld [vmem:[%s1 + $0x158] sm:$0xff]
        %v280 = vld [vmem:[%s1 + $0x160] sm:$0xff]
        %v281 = vld [vmem:[%s1 + $0x168] sm:$0xff]
        %v282 = vld [vmem:[%s1 + $0x170] sm:$0xff]
        %v283 = vld [vmem:[%s1 + $0x178] sm:$0xff]
        %v284 = vpack.c.bf16 %v237, %v236
        %v285 = vpack.c.bf16 %v239, %v238
        %v286 = vpack.c.bf16 %v241, %v240
        %v287 = vpack.c.bf16 %v243, %v242
        %v288 = vpack.c.bf16 %v245, %v244
        %v289 = vpack.c.bf16 %v247, %v246
        %v290 = vpack.c.bf16 %v249, %v248
        %v291 = vpack.c.bf16 %v251, %v250
        %v292 = vpack.c.bf16 %v253, %v252
        %v293 = vpack.c.bf16 %v255, %v254
        %v294 = vpack.c.bf16 %v257, %v256
        %v295 = vpack.c.bf16 %v259, %v258
        %v296 = vpack.c.bf16 %v261, %v260
        %v297 = vpack.c.bf16 %v263, %v262
        %v298 = vpack.c.bf16 %v265, %v264
        %v299 = vpack.c.bf16 %v267, %v266
        %v300 = vpack.c.bf16 %v269, %v268
        %v301 = vpack.c.bf16 %v271, %v270
        %v302 = vpack.c.bf16 %v273, %v272
        %v303 = vpack.c.bf16 %v275, %v274
        %v304 = vpack.c.bf16 %v277, %v276
        %v305 = vpack.c.bf16 %v279, %v278
        %v306 = vpack.c.bf16 %v281, %v280
        %v307 = vpack.c.bf16 %v283, %v282
        %vm308 = vcmask 523264
        %v310 = vsel %vm308, %v284, 0
        %v313 = vsel %vm308, %v285, 0
        %v316 = vsel %vm308, %v286, 0
        %v319 = vsel %vm308, %v287, 0
        %v322 = vsel %vm308, %v288, 0
        %v325 = vsel %vm308, %v289, 0
        %v328 = vsel %vm308, %v290, 0
        %v331 = vsel %vm308, %v291, 0
        %v334 = vsel %vm308, %v292, 0
        %v337 = vsel %vm308, %v293, 0
        %v340 = vsel %vm308, %v294, 0
        %v343 = vsel %vm308, %v295, 0
        %v346 = vsel %vm308, %v296, 0
        %v349 = vsel %vm308, %v297, 0
        %v352 = vsel %vm308, %v298, 0
        %v355 = vsel %vm308, %v299, 0
        %v358 = vsel %vm308, %v300, 0
        %v361 = vsel %vm308, %v301, 0
        %v364 = vsel %vm308, %v302, 0
        %v367 = vsel %vm308, %v303, 0
        %v370 = vsel %vm308, %v304, 0
        %v373 = vsel %vm308, %v305, 0
        %v376 = vsel %vm308, %v306, 0
        %v379 = vsel %vm308, %v307, 0
        %381 = vmatprep.subr.bf16.mxu0 0
        %382 = vmatpush1.bf16.msra.mxu0 0
        %383 = vmatprep.subr.bf16.mxu0 0
        %384 = vmatpush1.bf16.msra.mxu0 0
        %385 = vmatprep.subr.bf16.mxu0 0
        %386 = vmatpush1.bf16.msra.mxu0 0
        %387 = vmatprep.subr.bf16.mxu0 0
        %388 = vmatpush1.bf16.msra.mxu0 0
        %389 = vmatprep.subr.bf16.mxu0 0
        %390 = vmatpush1.bf16.msra.mxu0 %v235
        %391 = vmatprep.subr.bf16.mxu0 0
        %392 = vmatpush1.bf16.msra.mxu0 %v234
        %393 = vmatprep.subr.bf16.mxu0 0
        %394 = vmatpush1.bf16.msra.mxu0 %v233
        %395 = vmatprep.subr.bf16.mxu0 0
        %396 = vmatpush1.bf16.msra.mxu0 %v232
        %397 = vmatprep.subr.bf16.mxu0 0
        %398 = vmatpush2.bf16.msra.mxu0 0
        %399 = vmatprep.subr.bf16.mxu0 0
        %400 = vmatpush2.bf16.msra.mxu0 0
        %401 = vmatprep.subr.bf16.mxu0 0
        %402 = vmatpush2.bf16.msra.mxu0 0
        %403 = vmatprep.subr.bf16.mxu0 0
        %404 = vmatpush2.bf16.msra.mxu0 0
        %405 = vmatprep.subr.bf16.mxu0 0
        %406 = vmatpush2.bf16.msra.mxu0 0
        %407 = vmatprep.subr.bf16.mxu0 0
        %408 = vmatpush2.bf16.msra.mxu0 0
        %409 = vmatprep.subr.bf16.mxu0 0
        %410 = vmatpush2.bf16.msra.mxu0 0
        %411 = vmatprep.subr.bf16.mxu0 0
        %412 = vmatpush2.bf16.msra.mxu0 0
        %413 = vmatprep.mubr.bf16.mxu0 0
        %414 = vmatmul.mubr.bf16.gmra.mxu0 %v310
        %v415 = vpop.f32.mrf.mxu0
        %v416 = vadd.f32 0.0, %v415
        %v417 = vpop.f32.mrf.mxu0
        %v418 = vpop.f32.mrf.mxu0
        %v419 = vadd.f32 0.0, %v418
        %v420 = vpop.f32.mrf.mxu0
        %421 = vmatprep.mubr.bf16.mxu0 0
        %422 = vmatmul.mubr.bf16.gmra.mxu0 %v313
        %v423 = vpop.f32.mrf.mxu0
        %v424 = vadd.f32 0.0, %v423
        %v425 = vpop.f32.mrf.mxu0
        %v426 = vpop.f32.mrf.mxu0
        %v427 = vadd.f32 0.0, %v426
        %v428 = vpop.f32.mrf.mxu0
        %429 = vmatprep.mubr.bf16.mxu0 0
        %430 = vmatmul.mubr.bf16.gmra.mxu0 %v316
        %v431 = vpop.f32.mrf.mxu0
        %v432 = vadd.f32 0.0, %v431
        %v433 = vpop.f32.mrf.mxu0
        %v434 = vpop.f32.mrf.mxu0
        %v435 = vadd.f32 0.0, %v434
        %v436 = vpop.f32.mrf.mxu0
        %437 = vmatprep.mubr.bf16.mxu0 0
        %438 = vmatmul.mubr.bf16.gmra.mxu0 %v319
        %v439 = vpop.f32.mrf.mxu0
        %v440 = vadd.f32 0.0, %v439
        %v441 = vpop.f32.mrf.mxu0
        %v442 = vpop.f32.mrf.mxu0
        %v443 = vadd.f32 0.0, %v442
        %v444 = vpop.f32.mrf.mxu0
        %445 = vmatprep.mubr.bf16.mxu0 0
        %446 = vmatmul.mubr.bf16.gmra.mxu0 %v322
        %v447 = vpop.f32.mrf.mxu0
        %v448 = vadd.f32 0.0, %v447
        %v449 = vpop.f32.mrf.mxu0
        %v450 = vpop.f32.mrf.mxu0
        %v451 = vadd.f32 0.0, %v450
        %v452 = vpop.f32.mrf.mxu0
        %453 = vmatprep.mubr.bf16.mxu0 0
        %454 = vmatmul.mubr.bf16.gmra.mxu0 %v325
        %v455 = vpop.f32.mrf.mxu0
        %v456 = vadd.f32 0.0, %v455
        %v457 = vpop.f32.mrf.mxu0
        %v458 = vpop.f32.mrf.mxu0
        %v459 = vadd.f32 0.0, %v458
        %v460 = vpop.f32.mrf.mxu0
        %461 = vmatprep.mubr.bf16.mxu0 0
        %462 = vmatmul.mubr.bf16.gmra.mxu0 %v328
        %v463 = vpop.f32.mrf.mxu0
        %v464 = vadd.f32 0.0, %v463
        %v465 = vpop.f32.mrf.mxu0
        %v466 = vpop.f32.mrf.mxu0
        %v467 = vadd.f32 0.0, %v466
        %v468 = vpop.f32.mrf.mxu0
        %469 = vmatprep.mubr.bf16.mxu0 0
        %470 = vmatmul.mubr.bf16.gmra.mxu0 %v331
        %v471 = vpop.f32.mrf.mxu0
        %v472 = vadd.f32 0.0, %v471
        %v473 = vpop.f32.mrf.mxu0
        %v474 = vpop.f32.mrf.mxu0
        %v475 = vadd.f32 0.0, %v474
        %v476 = vpop.f32.mrf.mxu0
        %477 = vmatprep.mubr.bf16.mxu0 0
        %478 = vmatmul.mubr.bf16.gmra.mxu0 %v334
        %v479 = vpop.f32.mrf.mxu0
        %v480 = vadd.f32 0.0, %v479
        %v481 = vpop.f32.mrf.mxu0
        %v482 = vpop.f32.mrf.mxu0
        %v483 = vadd.f32 0.0, %v482
        %v484 = vpop.f32.mrf.mxu0
        %485 = vmatprep.mubr.bf16.mxu0 0
        %486 = vmatmul.mubr.bf16.gmra.mxu0 %v337
        %v487 = vpop.f32.mrf.mxu0
        %v488 = vadd.f32 0.0, %v487
        %v489 = vpop.f32.mrf.mxu0
        %v490 = vpop.f32.mrf.mxu0
        %v491 = vadd.f32 0.0, %v490
        %v492 = vpop.f32.mrf.mxu0
        %493 = vmatprep.mubr.bf16.mxu0 0
        %494 = vmatmul.mubr.bf16.gmra.mxu0 %v340
        %v495 = vpop.f32.mrf.mxu0
        %v496 = vadd.f32 0.0, %v495
        %v497 = vpop.f32.mrf.mxu0
        %v498 = vpop.f32.mrf.mxu0
        %v499 = vadd.f32 0.0, %v498
        %v500 = vpop.f32.mrf.mxu0
        %501 = vmatprep.mubr.bf16.mxu0 0
        %502 = vmatmul.mubr.bf16.gmra.mxu0 %v343
        %v503 = vpop.f32.mrf.mxu0
        %v504 = vadd.f32 0.0, %v503
        %v505 = vpop.f32.mrf.mxu0
        %v506 = vpop.f32.mrf.mxu0
        %v507 = vadd.f32 0.0, %v506
        %v508 = vpop.f32.mrf.mxu0
        %509 = vmatprep.mubr.bf16.mxu0 0
        %510 = vmatmul.mubr.bf16.gmra.mxu0 %v346
        %v511 = vpop.f32.mrf.mxu0
        %v512 = vadd.f32 0.0, %v511
        %v513 = vpop.f32.mrf.mxu0
        %v514 = vpop.f32.mrf.mxu0
        %v515 = vadd.f32 0.0, %v514
        %v516 = vpop.f32.mrf.mxu0
        %517 = vmatprep.mubr.bf16.mxu0 0
        %518 = vmatmul.mubr.bf16.gmra.mxu0 %v349
        %v519 = vpop.f32.mrf.mxu0
        %v520 = vadd.f32 0.0, %v519
        %v521 = vpop.f32.mrf.mxu0
        %v522 = vpop.f32.mrf.mxu0
        %v523 = vadd.f32 0.0, %v522
        %v524 = vpop.f32.mrf.mxu0
        %525 = vmatprep.mubr.bf16.mxu0 0
        %526 = vmatmul.mubr.bf16.gmra.mxu0 %v352
        %v527 = vpop.f32.mrf.mxu0
        %v528 = vadd.f32 0.0, %v527
        %v529 = vpop.f32.mrf.mxu0
        %v530 = vpop.f32.mrf.mxu0
        %v531 = vadd.f32 0.0, %v530
        %v532 = vpop.f32.mrf.mxu0
        %533 = vmatprep.mubr.bf16.mxu0 0
        %534 = vmatmul.mubr.bf16.gmra.mxu0 %v355
        %v535 = vpop.f32.mrf.mxu0
        %v536 = vadd.f32 0.0, %v535
        %v537 = vpop.f32.mrf.mxu0
        %v538 = vpop.f32.mrf.mxu0
        %v539 = vadd.f32 0.0, %v538
        %v540 = vpop.f32.mrf.mxu0
        %541 = vmatprep.mubr.bf16.mxu0 0
        %542 = vmatmul.mubr.bf16.gmra.mxu0 %v358
        %v543 = vpop.f32.mrf.mxu0
        %v544 = vadd.f32 0.0, %v543
        %v545 = vpop.f32.mrf.mxu0
        %v546 = vpop.f32.mrf.mxu0
        %v547 = vadd.f32 0.0, %v546
        %v548 = vpop.f32.mrf.mxu0
        %549 = vmatprep.mubr.bf16.mxu0 0
        %550 = vmatmul.mubr.bf16.gmra.mxu0 %v361
        %v551 = vpop.f32.mrf.mxu0
        %v552 = vadd.f32 0.0, %v551
        %v553 = vpop.f32.mrf.mxu0
        %v554 = vpop.f32.mrf.mxu0
        %v555 = vadd.f32 0.0, %v554
        %v556 = vpop.f32.mrf.mxu0
        %557 = vmatprep.mubr.bf16.mxu0 0
        %558 = vmatmul.mubr.bf16.gmra.mxu0 %v364
        %v559 = vpop.f32.mrf.mxu0
        %v560 = vadd.f32 0.0, %v559
        %v561 = vpop.f32.mrf.mxu0
        %v562 = vpop.f32.mrf.mxu0
        %v563 = vadd.f32 0.0, %v562
        %v564 = vpop.f32.mrf.mxu0
        %565 = vmatprep.mubr.bf16.mxu0 0
        %566 = vmatmul.mubr.bf16.gmra.mxu0 %v367
        %v567 = vpop.f32.mrf.mxu0
        %v568 = vadd.f32 0.0, %v567
        %v569 = vpop.f32.mrf.mxu0
        %v570 = vpop.f32.mrf.mxu0
        %v571 = vadd.f32 0.0, %v570
        %v572 = vpop.f32.mrf.mxu0
        %573 = vmatprep.mubr.bf16.mxu0 0
        %574 = vmatmul.mubr.bf16.gmra.mxu0 %v370
        %v575 = vpop.f32.mrf.mxu0
        %v576 = vadd.f32 0.0, %v575
        %v577 = vpop.f32.mrf.mxu0
        %v578 = vpop.f32.mrf.mxu0
        %v579 = vadd.f32 0.0, %v578
        %v580 = vpop.f32.mrf.mxu0
        %581 = vmatprep.mubr.bf16.mxu0 0
        %582 = vmatmul.mubr.bf16.gmra.mxu0 %v373
        %v583 = vpop.f32.mrf.mxu0
        %v584 = vadd.f32 0.0, %v583
        %v585 = vpop.f32.mrf.mxu0
        %v586 = vpop.f32.mrf.mxu0
        %v587 = vadd.f32 0.0, %v586
        %v588 = vpop.f32.mrf.mxu0
        %589 = vmatprep.mubr.bf16.mxu0 0
        %590 = vmatmul.mubr.bf16.gmra.mxu0 %v376
        %v591 = vpop.f32.mrf.mxu0
        %v592 = vadd.f32 0.0, %v591
        %v593 = vpop.f32.mrf.mxu0
        %v594 = vpop.f32.mrf.mxu0
        %v595 = vadd.f32 0.0, %v594
        %v596 = vpop.f32.mrf.mxu0
        %597 = vmatprep.mubr.bf16.mxu0 0
        %598 = vmatmul.mubr.bf16.gmra.mxu0 %v379
        %v599 = vpop.f32.mrf.mxu0
        %v600 = vadd.f32 0.0, %v599
        %v601 = vpop.f32.mrf.mxu0
        %v602 = vpop.f32.mrf.mxu0
        %v603 = vadd.f32 0.0, %v602
        %v604 = vpop.f32.mrf.mxu0
        %605 = vdwg.mxu0
        %v606 = vmax.f32 %v416, %v419
        %v607 = vmax.f32 %v606, %v424
        %v608 = vmax.f32 %v607, %v427
        %v609 = vrot.slane %v608, 4
        %v610 = vmax.f32 %v608, %v609
        %v611 = vrot.slane %v610, 2
        %v612 = vmax.f32 %v610, %v611
        %v613 = vrot.slane %v612, 1
        %v614 = vmax.f32 %v612, %v613
        %v615 = vmax.f32 %v432, %v435
        %v616 = vmax.f32 %v615, %v440
        %v617 = vmax.f32 %v616, %v443
        %v618 = vrot.slane %v617, 4
        %v619 = vmax.f32 %v617, %v618
        %v620 = vrot.slane %v619, 2
        %v621 = vmax.f32 %v619, %v620
        %v622 = vrot.slane %v621, 1
        %v623 = vmax.f32 %v621, %v622
        %v624 = vmax.f32 %v448, %v451
        %v625 = vmax.f32 %v624, %v456
        %v626 = vmax.f32 %v625, %v459
        %v627 = vrot.slane %v626, 4
        %v628 = vmax.f32 %v626, %v627
        %v629 = vrot.slane %v628, 2
        %v630 = vmax.f32 %v628, %v629
        %v631 = vrot.slane %v630, 1
        %v632 = vmax.f32 %v630, %v631
        %v633 = vmax.f32 %v464, %v467
        %v634 = vmax.f32 %v633, %v472
        %v635 = vmax.f32 %v634, %v475
        %v636 = vrot.slane %v635, 4
        %v637 = vmax.f32 %v635, %v636
        %v638 = vrot.slane %v637, 2
        %v639 = vmax.f32 %v637, %v638
        %v640 = vrot.slane %v639, 1
        %v641 = vmax.f32 %v639, %v640
        %v642 = vsub.f32 %v416, %v614
        %v643 = vsub.f32 %v419, %v614
        %v644 = vsub.f32 %v424, %v614
        %v645 = vsub.f32 %v427, %v614
        %v646 = vsub.f32 %v432, %v623
        %v647 = vsub.f32 %v435, %v623
        %v648 = vsub.f32 %v440, %v623
        %v649 = vsub.f32 %v443, %v623
        %v650 = vsub.f32 %v448, %v632
        %v651 = vsub.f32 %v451, %v632
        %v652 = vsub.f32 %v456, %v632
        %v653 = vsub.f32 %v459, %v632
        %v654 = vsub.f32 %v464, %v641
        %v655 = vsub.f32 %v467, %v641
        %v656 = vsub.f32 %v472, %v641
        %v657 = vsub.f32 %v475, %v641
        %v658 = vmul.f32 %v642, 1.442695
        %v659 = vpow.pop %v658
        %v660 = vmul.f32 %v643, 1.442695
        %v661 = vpow.pop %v660
        %v662 = vmul.f32 %v644, 1.442695
        %v663 = vpow.pop %v662
        %v664 = vmul.f32 %v645, 1.442695
        %v665 = vpow.pop %v664
        %v666 = vmul.f32 %v646, 1.442695
        %v667 = vpow.pop %v666
        %v668 = vmul.f32 %v647, 1.442695
        %v669 = vpow.pop %v668
        %v670 = vmul.f32 %v648, 1.442695
        %v671 = vpow.pop %v670
        %v672 = vmul.f32 %v649, 1.442695
        %v673 = vpow.pop %v672
        %v674 = vmul.f32 %v650, 1.442695
        %v675 = vpow.pop %v674
        %v676 = vmul.f32 %v651, 1.442695
        %v677 = vpow.pop %v676
        %v678 = vmul.f32 %v652, 1.442695
        %v679 = vpow.pop %v678
        %v680 = vmul.f32 %v653, 1.442695
        %v681 = vpow.pop %v680
        %v682 = vmul.f32 %v654, 1.442695
        %v683 = vpow.pop %v682
        %v684 = vmul.f32 %v655, 1.442695
        %v685 = vpow.pop %v684
        %v686 = vmul.f32 %v656, 1.442695
        %v687 = vpow.pop %v686
        %v688 = vmul.f32 %v657, 1.442695
        %v689 = vpow.pop %v688
        %v690 = vadd.f32 %v659, %v661
        %v691 = vadd.f32 %v690, %v663
        %v692 = vadd.f32 %v691, %v665
        %v693 = vrot.slane %v692, 4
        %v694 = vadd.f32 %v692, %v693
        %v695 = vrot.slane %v694, 2
        %v696 = vadd.f32 %v694, %v695
        %v697 = vrot.slane %v696, 1
        %v698 = vadd.f32 %v696, %v697
        %v699 = vadd.f32 %v667, %v669
        %v700 = vadd.f32 %v699, %v671
        %v701 = vadd.f32 %v700, %v673
        %v702 = vrot.slane %v701, 4
        %v703 = vadd.f32 %v701, %v702
        %v704 = vrot.slane %v703, 2
        %v705 = vadd.f32 %v703, %v704
        %v706 = vrot.slane %v705, 1
        %v707 = vadd.f32 %v705, %v706
        %v708 = vadd.f32 %v675, %v677
        %v709 = vadd.f32 %v708, %v679
        %v710 = vadd.f32 %v709, %v681
        %v711 = vrot.slane %v710, 4
        %v712 = vadd.f32 %v710, %v711
        %v713 = vrot.slane %v712, 2
        %v714 = vadd.f32 %v712, %v713
        %v715 = vrot.slane %v714, 1
        %v716 = vadd.f32 %v714, %v715
        %v717 = vadd.f32 %v683, %v685
        %v718 = vadd.f32 %v717, %v687
        %v719 = vadd.f32 %v718, %v689
        %v720 = vrot.slane %v719, 4
        %v721 = vadd.f32 %v719, %v720
        %v722 = vrot.slane %v721, 2
        %v723 = vadd.f32 %v721, %v722
        %v724 = vrot.slane %v723, 1
        %v725 = vadd.f32 %v723, %v724
        %v726 = vrcp.pop %v698
        %v727 = vrcp.pop %v707
        %v728 = vrcp.pop %v716
        %v729 = vrcp.pop %v725
        %v730 = vmul.f32 %v726, 0.17677669
        %v731 = vmul.f32 %v727, 0.17677669
        %v732 = vmul.f32 %v728, 0.17677669
        %v733 = vmul.f32 %v729, 0.17677669
        %v734 = vmul.f32 %v659, %v730
        %v735 = vmul.f32 %v661, %v730
        %v736 = vmul.f32 %v663, %v730
        %v737 = vmul.f32 %v665, %v730
        %v738 = vmul.f32 %v667, %v731
        %v739 = vmul.f32 %v669, %v731
        %v740 = vmul.f32 %v671, %v731
        %v741 = vmul.f32 %v673, %v731
        %v742 = vmul.f32 %v675, %v732
        %v743 = vmul.f32 %v677, %v732
        %v744 = vmul.f32 %v679, %v732
        %v745 = vmul.f32 %v681, %v732
        %v746 = vmul.f32 %v683, %v733
        %v747 = vmul.f32 %v685, %v733
        %v748 = vmul.f32 %v687, %v733
        %v749 = vmul.f32 %v689, %v733
        %750 = vmax.xlane.f32.xlu0 %v480
        %v751 = vpop.xlane.xlu0 %750
        %752 = vmax.xlane.f32.xlu0 %v483
        %v753 = vpop.xlane.xlu0 %752
        %754 = vmax.xlane.f32.xlu0 %v488
        %v755 = vpop.xlane.xlu0 %754
        %756 = vmax.xlane.f32.xlu0 %v491
        %v757 = vpop.xlane.xlu0 %756
        %758 = vmax.xlane.f32.xlu0 %v496
        %v759 = vpop.xlane.xlu0 %758
        %760 = vmax.xlane.f32.xlu0 %v499
        %v761 = vpop.xlane.xlu0 %760
        %762 = vmax.xlane.f32.xlu0 %v504
        %v763 = vpop.xlane.xlu0 %762
        %764 = vmax.xlane.f32.xlu0 %v507
        %v765 = vpop.xlane.xlu0 %764
        %766 = vmax.xlane.f32.xlu0 %v512
        %v767 = vpop.xlane.xlu0 %766
        %768 = vmax.xlane.f32.xlu0 %v515
        %v769 = vpop.xlane.xlu0 %768
        %770 = vmax.xlane.f32.xlu0 %v520
        %v771 = vpop.xlane.xlu0 %770
        %772 = vmax.xlane.f32.xlu0 %v523
        %v773 = vpop.xlane.xlu0 %772
        %774 = vmax.xlane.f32.xlu0 %v528
        %v775 = vpop.xlane.xlu0 %774
        %776 = vmax.xlane.f32.xlu0 %v531
        %v777 = vpop.xlane.xlu0 %776
        %778 = vmax.xlane.f32.xlu0 %v536
        %v779 = vpop.xlane.xlu0 %778
        %780 = vmax.xlane.f32.xlu0 %v539
        %v781 = vpop.xlane.xlu0 %780
        %v782 = vsub.f32 %v480, %v751
        %v783 = vsub.f32 %v483, %v753
        %v784 = vsub.f32 %v488, %v755
        %v785 = vsub.f32 %v491, %v757
        %v786 = vsub.f32 %v496, %v759
        %v787 = vsub.f32 %v499, %v761
        %v788 = vsub.f32 %v504, %v763
        %v789 = vsub.f32 %v507, %v765
        %v790 = vsub.f32 %v512, %v767
        %v791 = vsub.f32 %v515, %v769
        %v792 = vsub.f32 %v520, %v771
        %v793 = vsub.f32 %v523, %v773
        %v794 = vsub.f32 %v528, %v775
        %v795 = vsub.f32 %v531, %v777
        %v796 = vsub.f32 %v536, %v779
        %v797 = vsub.f32 %v539, %v781
        %v798 = vmul.f32 %v782, 1.442695
        %v799 = vpow.pop %v798
        %v800 = vmul.f32 %v783, 1.442695
        %v801 = vpow.pop %v800
        %v802 = vmul.f32 %v784, 1.442695
        %v803 = vpow.pop %v802
        %v804 = vmul.f32 %v785, 1.442695
        %v805 = vpow.pop %v804
        %v806 = vmul.f32 %v786, 1.442695
        %v807 = vpow.pop %v806
        %v808 = vmul.f32 %v787, 1.442695
        %v809 = vpow.pop %v808
        %v810 = vmul.f32 %v788, 1.442695
        %v811 = vpow.pop %v810
        %v812 = vmul.f32 %v789, 1.442695
        %v813 = vpow.pop %v812
        %v814 = vmul.f32 %v790, 1.442695
        %v815 = vpow.pop %v814
        %v816 = vmul.f32 %v791, 1.442695
        %v817 = vpow.pop %v816
        %v818 = vmul.f32 %v792, 1.442695
        %v819 = vpow.pop %v818
        %v820 = vmul.f32 %v793, 1.442695
        %v821 = vpow.pop %v820
        %v822 = vmul.f32 %v794, 1.442695
        %v823 = vpow.pop %v822
        %v824 = vmul.f32 %v795, 1.442695
        %v825 = vpow.pop %v824
        %v826 = vmul.f32 %v796, 1.442695
        %v827 = vpow.pop %v826
        %v828 = vmul.f32 %v797, 1.442695
        %v829 = vpow.pop %v828
        %830 = vadd.xlane.f32.xlu0 %v799
        %v831 = vpop.xlane.xlu0 %830
        %832 = vadd.xlane.f32.xlu0 %v801
        %v833 = vpop.xlane.xlu0 %832
        %834 = vadd.xlane.f32.xlu0 %v803
        %v835 = vpop.xlane.xlu0 %834
        %836 = vadd.xlane.f32.xlu0 %v805
        %v837 = vpop.xlane.xlu0 %836
        %838 = vadd.xlane.f32.xlu0 %v807
        %v839 = vpop.xlane.xlu0 %838
        %840 = vadd.xlane.f32.xlu0 %v809
        %v841 = vpop.xlane.xlu0 %840
        %842 = vadd.xlane.f32.xlu0 %v811
        %v843 = vpop.xlane.xlu0 %842
        %844 = vadd.xlane.f32.xlu0 %v813
        %v845 = vpop.xlane.xlu0 %844
        %846 = vadd.xlane.f32.xlu0 %v815
        %v847 = vpop.xlane.xlu0 %846
        %848 = vadd.xlane.f32.xlu0 %v817
        %v849 = vpop.xlane.xlu0 %848
        %850 = vadd.xlane.f32.xlu0 %v819
        %v851 = vpop.xlane.xlu0 %850
        %852 = vadd.xlane.f32.xlu0 %v821
        %v853 = vpop.xlane.xlu0 %852
        %854 = vadd.xlane.f32.xlu0 %v823
        %v855 = vpop.xlane.xlu0 %854
        %856 = vadd.xlane.f32.xlu0 %v825
        %v857 = vpop.xlane.xlu0 %856
        %858 = vadd.xlane.f32.xlu0 %v827
        %v859 = vpop.xlane.xlu0 %858
        %860 = vadd.xlane.f32.xlu0 %v829
        %v861 = vpop.xlane.xlu0 %860
        %v862 = vrcp.pop %v831
        %v863 = vrcp.pop %v833
        %v864 = vrcp.pop %v835
        %v865 = vrcp.pop %v837
        %v866 = vrcp.pop %v839
        %v867 = vrcp.pop %v841
        %v868 = vrcp.pop %v843
        %v869 = vrcp.pop %v845
        %v870 = vrcp.pop %v847
        %v871 = vrcp.pop %v849
        %v872 = vrcp.pop %v851
        %v873 = vrcp.pop %v853
        %v874 = vrcp.pop %v855
        %v875 = vrcp.pop %v857
        %v876 = vrcp.pop %v859
        %v877 = vrcp.pop %v861
        %v878 = vmul.f32 %v799, %v862
        %v879 = vmul.f32 %v801, %v863
        %v880 = vmul.f32 %v803, %v864
        %v881 = vmul.f32 %v805, %v865
        %v882 = vmul.f32 %v807, %v866
        %v883 = vmul.f32 %v809, %v867
        %v884 = vmul.f32 %v811, %v868
        %v885 = vmul.f32 %v813, %v869
        %v886 = vmul.f32 %v815, %v870
        %v887 = vmul.f32 %v817, %v871
        %v888 = vmul.f32 %v819, %v872
        %v889 = vmul.f32 %v821, %v873
        %v890 = vmul.f32 %v823, %v874
        %v891 = vmul.f32 %v825, %v875
        %v892 = vmul.f32 %v827, %v876
        %v893 = vmul.f32 %v829, %v877
        %v894 = vpack.c.bf16 %v735, %v734
        %v895 = vpack.c.bf16 %v737, %v736
        %v896 = vpack.c.bf16 %v739, %v738
        %v897 = vpack.c.bf16 %v741, %v740
        %v898 = vpack.c.bf16 %v743, %v742
        %v899 = vpack.c.bf16 %v745, %v744
        %v900 = vpack.c.bf16 %v747, %v746
        %v901 = vpack.c.bf16 %v749, %v748
        %v902 = vpack.c.bf16 %v879, %v878
        %v903 = vpack.c.bf16 %v881, %v880
        %v904 = vpack.c.bf16 %v883, %v882
        %v905 = vpack.c.bf16 %v885, %v884
        %v906 = vpack.c.bf16 %v887, %v886
        %v907 = vpack.c.bf16 %v889, %v888
        %v908 = vpack.c.bf16 %v891, %v890
        %v909 = vpack.c.bf16 %v893, %v892
        %v910 = vpack.c.bf16 %v547, %v544
        %v911 = vpack.c.bf16 %v555, %v552
        %v912 = vpack.c.bf16 %v563, %v560
        %v913 = vpack.c.bf16 %v571, %v568
        %v914 = vpack.c.bf16 %v579, %v576
        %v915 = vpack.c.bf16 %v587, %v584
        %v916 = vpack.c.bf16 %v595, %v592
        %v917 = vpack.c.bf16 %v603, %v600
        %918 = vmatprep.subr.bf16.mxu0 0
        %919 = vmatpush1.bf16.xpose.msra.mxu0 0
        %920 = vmatprep.subr.bf16.mxu0 0
        %921 = vmatpush1.bf16.xpose.msra.mxu0 0
        %922 = vmatprep.subr.bf16.mxu0 0
        %923 = vmatpush1.bf16.xpose.msra.mxu0 0
        %924 = vmatprep.subr.bf16.mxu0 0
        %925 = vmatpush1.bf16.xpose.msra.mxu0 0
        %926 = vmatprep.subr.bf16.mxu0 0
        %927 = vmatpush1.bf16.xpose.msra.mxu0 0
        %928 = vmatprep.subr.bf16.mxu0 0
        %929 = vmatpush1.bf16.xpose.msra.mxu0 0
        %930 = vmatprep.subr.bf16.mxu0 0
        %931 = vmatpush1.bf16.xpose.msra.mxu0 %v903
        %932 = vmatprep.subr.bf16.mxu0 0
        %933 = vmatpush1.bf16.xpose.msra.mxu0 %v902
        %934 = vmatprep.subr.bf16.mxu0 0
        %935 = vmatpush2.bf16.xpose.msra.mxu0 0
        %936 = vmatprep.subr.bf16.mxu0 0
        %937 = vmatpush2.bf16.xpose.msra.mxu0 0
        %938 = vmatprep.subr.bf16.mxu0 0
        %939 = vmatpush2.bf16.xpose.msra.mxu0 0
        %940 = vmatprep.subr.bf16.mxu0 0
        %941 = vmatpush2.bf16.xpose.msra.mxu0 0
        %942 = vmatprep.subr.bf16.mxu0 0
        %943 = vmatpush2.bf16.xpose.msra.mxu0 0
        %944 = vmatprep.subr.bf16.mxu0 0
        %945 = vmatpush2.bf16.xpose.msra.mxu0 0
        %946 = vmatprep.subr.bf16.mxu0 0
        %947 = vmatpush2.bf16.xpose.msra.mxu0 0
        %948 = vmatprep.subr.bf16.mxu0 0
        %949 = vmatpush2.bf16.xpose.msra.mxu0 0
        %950 = vmatprep.mubr.bf16.mxu0 0
        %951 = vmatmul.mubr.bf16.gmra.mxu0 %v910
        %v952 = vpop.f32.mrf.mxu0
        %v953 = vadd.f32 0.0, %v952
        %v954 = vpop.f32.mrf.mxu0
        %v955 = vpop.f32.mrf.mxu0
        %v956 = vadd.f32 0.0, %v955
        %v957 = vpop.f32.mrf.mxu0
        %958 = vmatprep.mubr.bf16.mxu0 0
        %959 = vmatmul.mubr.bf16.gmra.mxu0 %v911
        %v960 = vpop.f32.mrf.mxu0
        %v961 = vadd.f32 0.0, %v960
        %v962 = vpop.f32.mrf.mxu0
        %v963 = vpop.f32.mrf.mxu0
        %v964 = vadd.f32 0.0, %v963
        %v965 = vpop.f32.mrf.mxu0
        %966 = vdwg.mxu0
        %967 = vmatprep.subr.bf16.mxu0 0
        %968 = vmatpush1.bf16.xpose.msra.mxu0 0
        %969 = vmatprep.subr.bf16.mxu0 0
        %970 = vmatpush1.bf16.xpose.msra.mxu0 0
        %971 = vmatprep.subr.bf16.mxu0 0
        %972 = vmatpush1.bf16.xpose.msra.mxu0 0
        %973 = vmatprep.subr.bf16.mxu0 0
        %974 = vmatpush1.bf16.xpose.msra.mxu0 0
        %975 = vmatprep.subr.bf16.mxu0 0
        %976 = vmatpush1.bf16.xpose.msra.mxu0 0
        %977 = vmatprep.subr.bf16.mxu0 0
        %978 = vmatpush1.bf16.xpose.msra.mxu0 0
        %979 = vmatprep.subr.bf16.mxu0 0
        %980 = vmatpush1.bf16.xpose.msra.mxu0 %v905
        %981 = vmatprep.subr.bf16.mxu0 0
        %982 = vmatpush1.bf16.xpose.msra.mxu0 %v904
        %983 = vmatprep.subr.bf16.mxu0 0
        %984 = vmatpush2.bf16.xpose.msra.mxu0 0
        %985 = vmatprep.subr.bf16.mxu0 0
        %986 = vmatpush2.bf16.xpose.msra.mxu0 0
        %987 = vmatprep.subr.bf16.mxu0 0
        %988 = vmatpush2.bf16.xpose.msra.mxu0 0
        %989 = vmatprep.subr.bf16.mxu0 0
        %990 = vmatpush2.bf16.xpose.msra.mxu0 0
        %991 = vmatprep.subr.bf16.mxu0 0
        %992 = vmatpush2.bf16.xpose.msra.mxu0 0
        %993 = vmatprep.subr.bf16.mxu0 0
        %994 = vmatpush2.bf16.xpose.msra.mxu0 0
        %995 = vmatprep.subr.bf16.mxu0 0
        %996 = vmatpush2.bf16.xpose.msra.mxu0 0
        %997 = vmatprep.subr.bf16.mxu0 0
        %998 = vmatpush2.bf16.xpose.msra.mxu0 0
        %999 = vmatprep.mubr.bf16.mxu0 0
        %1000 = vmatmul.mubr.bf16.gmra.mxu0 %v912
        %v1001 = vpop.f32.mrf.mxu0
        %v1002 = vadd.f32 0.0, %v1001
        %v1003 = vpop.f32.mrf.mxu0
        %v1004 = vpop.f32.mrf.mxu0
        %v1005 = vadd.f32 0.0, %v1004
        %v1006 = vpop.f32.mrf.mxu0
        %1007 = vmatprep.mubr.bf16.mxu0 0
        %1008 = vmatmul.mubr.bf16.gmra.mxu0 %v913
        %v1009 = vpop.f32.mrf.mxu0
        %v1010 = vadd.f32 0.0, %v1009
        %v1011 = vpop.f32.mrf.mxu0
        %v1012 = vpop.f32.mrf.mxu0
        %v1013 = vadd.f32 0.0, %v1012
        %v1014 = vpop.f32.mrf.mxu0
        %1015 = vdwg.mxu0
        %1016 = vmatprep.subr.bf16.mxu0 0
        %1017 = vmatpush1.bf16.xpose.msra.mxu0 0
        %1018 = vmatprep.subr.bf16.mxu0 0
        %1019 = vmatpush1.bf16.xpose.msra.mxu0 0
        %1020 = vmatprep.subr.bf16.mxu0 0
        %1021 = vmatpush1.bf16.xpose.msra.mxu0 0
        %1022 = vmatprep.subr.bf16.mxu0 0
        %1023 = vmatpush1.bf16.xpose.msra.mxu0 0
        %1024 = vmatprep.subr.bf16.mxu0 0
        %1025 = vmatpush1.bf16.xpose.msra.mxu0 0
        %1026 = vmatprep.subr.bf16.mxu0 0
        %1027 = vmatpush1.bf16.xpose.msra.mxu0 0
        %1028 = vmatprep.subr.bf16.mxu0 0
        %1029 = vmatpush1.bf16.xpose.msra.mxu0 %v907
        %1030 = vmatprep.subr.bf16.mxu0 0
        %1031 = vmatpush1.bf16.xpose.msra.mxu0 %v906
        %1032 = vmatprep.subr.bf16.mxu0 0
        %1033 = vmatpush2.bf16.xpose.msra.mxu0 0
        %1034 = vmatprep.subr.bf16.mxu0 0
        %1035 = vmatpush2.bf16.xpose.msra.mxu0 0
        %1036 = vmatprep.subr.bf16.mxu0 0
        %1037 = vmatpush2.bf16.xpose.msra.mxu0 0
        %1038 = vmatprep.subr.bf16.mxu0 0
        %1039 = vmatpush2.bf16.xpose.msra.mxu0 0
        %1040 = vmatprep.subr.bf16.mxu0 0
        %1041 = vmatpush2.bf16.xpose.msra.mxu0 0
        %1042 = vmatprep.subr.bf16.mxu0 0
        %1043 = vmatpush2.bf16.xpose.msra.mxu0 0
        %1044 = vmatprep.subr.bf16.mxu0 0
        %1045 = vmatpush2.bf16.xpose.msra.mxu0 0
        %1046 = vmatprep.subr.bf16.mxu0 0
        %1047 = vmatpush2.bf16.xpose.msra.mxu0 0
        %1048 = vmatprep.mubr.bf16.mxu0 0
        %1049 = vmatmul.mubr.bf16.gmra.mxu0 %v914
        %v1050 = vpop.f32.mrf.mxu0
        %v1051 = vadd.f32 0.0, %v1050
        %v1052 = vpop.f32.mrf.mxu0
        %v1053 = vpop.f32.mrf.mxu0
        %v1054 = vadd.f32 0.0, %v1053
        %v1055 = vpop.f32.mrf.mxu0
        %1056 = vmatprep.mubr.bf16.mxu0 0
        %1057 = vmatmul.mubr.bf16.gmra.mxu0 %v915
        %v1058 = vpop.f32.mrf.mxu0
        %v1059 = vadd.f32 0.0, %v1058
        %v1060 = vpop.f32.mrf.mxu0
        %v1061 = vpop.f32.mrf.mxu0
        %v1062 = vadd.f32 0.0, %v1061
        %v1063 = vpop.f32.mrf.mxu0
        %1064 = vdwg.mxu0
        %1065 = vmatprep.subr.bf16.mxu0 0
        %1066 = vmatpush1.bf16.xpose.msra.mxu0 0
        %1067 = vmatprep.subr.bf16.mxu0 0
        %1068 = vmatpush1.bf16.xpose.msra.mxu0 0
        %1069 = vmatprep.subr.bf16.mxu0 0
        %1070 = vmatpush1.bf16.xpose.msra.mxu0 0
        %1071 = vmatprep.subr.bf16.mxu0 0
        %1072 = vmatpush1.bf16.xpose.msra.mxu0 0
        %1073 = vmatprep.subr.bf16.mxu0 0
        %1074 = vmatpush1.bf16.xpose.msra.mxu0 0
        %1075 = vmatprep.subr.bf16.mxu0 0
        %1076 = vmatpush1.bf16.xpose.msra.mxu0 0
        %1077 = vmatprep.subr.bf16.mxu0 0
        %1078 = vmatpush1.bf16.xpose.msra.mxu0 %v909
        %1079 = vmatprep.subr.bf16.mxu0 0
        %1080 = vmatpush1.bf16.xpose.msra.mxu0 %v908
        %1081 = vmatprep.subr.bf16.mxu0 0
        %1082 = vmatpush2.bf16.xpose.msra.mxu0 0
        %1083 = vmatprep.subr.bf16.mxu0 0
        %1084 = vmatpush2.bf16.xpose.msra.mxu0 0
        %1085 = vmatprep.subr.bf16.mxu0 0
        %1086 = vmatpush2.bf16.xpose.msra.mxu0 0
        %1087 = vmatprep.subr.bf16.mxu0 0
        %1088 = vmatpush2.bf16.xpose.msra.mxu0 0
        %1089 = vmatprep.subr.bf16.mxu0 0
        %1090 = vmatpush2.bf16.xpose.msra.mxu0 0
        %1091 = vmatprep.subr.bf16.mxu0 0
        %1092 = vmatpush2.bf16.xpose.msra.mxu0 0
        %1093 = vmatprep.subr.bf16.mxu0 0
        %1094 = vmatpush2.bf16.xpose.msra.mxu0 0
        %1095 = vmatprep.subr.bf16.mxu0 0
        %1096 = vmatpush2.bf16.xpose.msra.mxu0 0
        %1097 = vmatprep.mubr.bf16.mxu0 0
        %1098 = vmatmul.mubr.bf16.gmra.mxu0 %v916
        %v1099 = vpop.f32.mrf.mxu0
        %v1100 = vadd.f32 0.0, %v1099
        %v1101 = vpop.f32.mrf.mxu0
        %v1102 = vpop.f32.mrf.mxu0
        %v1103 = vadd.f32 0.0, %v1102
        %v1104 = vpop.f32.mrf.mxu0
        %1105 = vmatprep.mubr.bf16.mxu0 0
        %1106 = vmatmul.mubr.bf16.gmra.mxu0 %v917
        %v1107 = vpop.f32.mrf.mxu0
        %v1108 = vadd.f32 0.0, %v1107
        %v1109 = vpop.f32.mrf.mxu0
        %v1110 = vpop.f32.mrf.mxu0
        %v1111 = vadd.f32 0.0, %v1110
        %v1112 = vpop.f32.mrf.mxu0
        %1113 = vdwg.mxu0
        %v1114 = vpack.c.bf16 %v956, %v953
        %v1115 = vpack.c.bf16 %v964, %v961
        %v1116 = vpack.c.bf16 %v1005, %v1002
        %v1117 = vpack.c.bf16 %v1013, %v1010
        %v1118 = vpack.c.bf16 %v1054, %v1051
        %v1119 = vpack.c.bf16 %v1062, %v1059
        %v1120 = vpack.c.bf16 %v1103, %v1100
        %v1121 = vpack.c.bf16 %v1111, %v1108
        %vm1122 = vcmask 261120
        %v1124 = vsel %vm1122, %v1114, 0
        %v1127 = vsel %vm1122, %v1115, 0
        %1129 = vmatprep.subr.bf16.mxu0 0
        %1130 = vmatpush1.bf16.msra.mxu0 0
        %1131 = vmatprep.subr.bf16.mxu0 0
        %1132 = vmatpush1.bf16.msra.mxu0 0
        %1133 = vmatprep.subr.bf16.mxu0 0
        %1134 = vmatpush1.bf16.msra.mxu0 0
        %1135 = vmatprep.subr.bf16.mxu0 0
        %1136 = vmatpush1.bf16.msra.mxu0 0
        %1137 = vmatprep.subr.bf16.mxu0 0
        %1138 = vmatpush1.bf16.msra.mxu0 0
        %1139 = vmatprep.subr.bf16.mxu0 0
        %1140 = vmatpush1.bf16.msra.mxu0 0
        %1141 = vmatprep.subr.bf16.mxu0 0
        %1142 = vmatpush1.bf16.msra.mxu0 %v895
        %1143 = vmatprep.subr.bf16.mxu0 0
        %1144 = vmatpush1.bf16.msra.mxu0 %v894
        %1145 = vmatprep.subr.bf16.mxu0 0
        %1146 = vmatpush2.bf16.msra.mxu0 0
        %1147 = vmatprep.subr.bf16.mxu0 0
        %1148 = vmatpush2.bf16.msra.mxu0 0
        %1149 = vmatprep.subr.bf16.mxu0 0
        %1150 = vmatpush2.bf16.msra.mxu0 0
        %1151 = vmatprep.subr.bf16.mxu0 0
        %1152 = vmatpush2.bf16.msra.mxu0 0
        %1153 = vmatprep.subr.bf16.mxu0 0
        %1154 = vmatpush2.bf16.msra.mxu0 0
        %1155 = vmatprep.subr.bf16.mxu0 0
        %1156 = vmatpush2.bf16.msra.mxu0 0
        %1157 = vmatprep.subr.bf16.mxu0 0
        %1158 = vmatpush2.bf16.msra.mxu0 0
        %1159 = vmatprep.subr.bf16.mxu0 0
        %1160 = vmatpush2.bf16.msra.mxu0 0
        %1161 = vmatprep.mubr.bf16.mxu0 0
        %1162 = vmatmul.mubr.bf16.gmra.mxu0 %v1124
        %v1163 = vpop.f32.mrf.mxu0
        %v1164 = vadd.f32 0.0, %v1163
        %v1165 = vpop.f32.mrf.mxu0
        %v1166 = vpop.f32.mrf.mxu0
        %v1167 = vadd.f32 0.0, %v1166
        %v1168 = vpop.f32.mrf.mxu0
        %1169 = vmatprep.mubr.bf16.mxu0 0
        %1170 = vmatmul.mubr.bf16.gmra.mxu0 %v1127
        %v1171 = vpop.f32.mrf.mxu0
        %v1172 = vadd.f32 0.0, %v1171
        %v1173 = vpop.f32.mrf.mxu0
        %v1174 = vpop.f32.mrf.mxu0
        %v1175 = vadd.f32 0.0, %v1174
        %v1176 = vpop.f32.mrf.mxu0
        %1177 = vdwg.mxu0
        %v1179 = vsel %vm1122, %v1116, 0
        %v1182 = vsel %vm1122, %v1117, 0
        %1184 = vmatprep.subr.bf16.mxu0 0
        %1185 = vmatpush1.bf16.msra.mxu0 0
        %1186 = vmatprep.subr.bf16.mxu0 0
        %1187 = vmatpush1.bf16.msra.mxu0 0
        %1188 = vmatprep.subr.bf16.mxu0 0
        %1189 = vmatpush1.bf16.msra.mxu0 0
        %1190 = vmatprep.subr.bf16.mxu0 0
        %1191 = vmatpush1.bf16.msra.mxu0 0
        %1192 = vmatprep.subr.bf16.mxu0 0
        %1193 = vmatpush1.bf16.msra.mxu0 0
        %1194 = vmatprep.subr.bf16.mxu0 0
        %1195 = vmatpush1.bf16.msra.mxu0 0
        %1196 = vmatprep.subr.bf16.mxu0 0
        %1197 = vmatpush1.bf16.msra.mxu0 %v897
        %1198 = vmatprep.subr.bf16.mxu0 0
        %1199 = vmatpush1.bf16.msra.mxu0 %v896
        %1200 = vmatprep.subr.bf16.mxu0 0
        %1201 = vmatpush2.bf16.msra.mxu0 0
        %1202 = vmatprep.subr.bf16.mxu0 0
        %1203 = vmatpush2.bf16.msra.mxu0 0
        %1204 = vmatprep.subr.bf16.mxu0 0
        %1205 = vmatpush2.bf16.msra.mxu0 0
        %1206 = vmatprep.subr.bf16.mxu0 0
        %1207 = vmatpush2.bf16.msra.mxu0 0
        %1208 = vmatprep.subr.bf16.mxu0 0
        %1209 = vmatpush2.bf16.msra.mxu0 0
        %1210 = vmatprep.subr.bf16.mxu0 0
        %1211 = vmatpush2.bf16.msra.mxu0 0
        %1212 = vmatprep.subr.bf16.mxu0 0
        %1213 = vmatpush2.bf16.msra.mxu0 0
        %1214 = vmatprep.subr.bf16.mxu0 0
        %1215 = vmatpush2.bf16.msra.mxu0 0
        %1216 = vmatprep.mubr.bf16.mxu0 0
        %1217 = vmatmul.mubr.bf16.gmra.mxu0 %v1179
        %v1218 = vpop.f32.mrf.mxu0
        %v1219 = vadd.f32 0.0, %v1218
        %v1220 = vpop.f32.mrf.mxu0
        %v1221 = vpop.f32.mrf.mxu0
        %v1222 = vadd.f32 0.0, %v1221
        %v1223 = vpop.f32.mrf.mxu0
        %1224 = vmatprep.mubr.bf16.mxu0 0
        %1225 = vmatmul.mubr.bf16.gmra.mxu0 %v1182
        %v1226 = vpop.f32.mrf.mxu0
        %v1227 = vadd.f32 0.0, %v1226
        %v1228 = vpop.f32.mrf.mxu0
        %v1229 = vpop.f32.mrf.mxu0
        %v1230 = vadd.f32 0.0, %v1229
        %v1231 = vpop.f32.mrf.mxu0
        %1232 = vdwg.mxu0
        %v1234 = vsel %vm1122, %v1118, 0
        %v1237 = vsel %vm1122, %v1119, 0
        %1239 = vmatprep.subr.bf16.mxu0 0
        %1240 = vmatpush1.bf16.msra.mxu0 0
        %1241 = vmatprep.subr.bf16.mxu0 0
        %1242 = vmatpush1.bf16.msra.mxu0 0
        %1243 = vmatprep.subr.bf16.mxu0 0
        %1244 = vmatpush1.bf16.msra.mxu0 0
        %1245 = vmatprep.subr.bf16.mxu0 0
        %1246 = vmatpush1.bf16.msra.mxu0 0
        %1247 = vmatprep.subr.bf16.mxu0 0
        %1248 = vmatpush1.bf16.msra.mxu0 0
        %1249 = vmatprep.subr.bf16.mxu0 0
        %1250 = vmatpush1.bf16.msra.mxu0 0
        %1251 = vmatprep.subr.bf16.mxu0 0
        %1252 = vmatpush1.bf16.msra.mxu0 %v899
        %1253 = vmatprep.subr.bf16.mxu0 0
        %1254 = vmatpush1.bf16.msra.mxu0 %v898
        %1255 = vmatprep.subr.bf16.mxu0 0
        %1256 = vmatpush2.bf16.msra.mxu0 0
        %1257 = vmatprep.subr.bf16.mxu0 0
        %1258 = vmatpush2.bf16.msra.mxu0 0
        %1259 = vmatprep.subr.bf16.mxu0 0
        %1260 = vmatpush2.bf16.msra.mxu0 0
        %1261 = vmatprep.subr.bf16.mxu0 0
        %1262 = vmatpush2.bf16.msra.mxu0 0
        %1263 = vmatprep.subr.bf16.mxu0 0
        %1264 = vmatpush2.bf16.msra.mxu0 0
        %1265 = vmatprep.subr.bf16.mxu0 0
        %1266 = vmatpush2.bf16.msra.mxu0 0
        %1267 = vmatprep.subr.bf16.mxu0 0
        %1268 = vmatpush2.bf16.msra.mxu0 0
        %1269 = vmatprep.subr.bf16.mxu0 0
        %1270 = vmatpush2.bf16.msra.mxu0 0
        %1271 = vmatprep.mubr.bf16.mxu0 0
        %1272 = vmatmul.mubr.bf16.gmra.mxu0 %v1234
        %v1273 = vpop.f32.mrf.mxu0
        %v1274 = vadd.f32 0.0, %v1273
        %v1275 = vpop.f32.mrf.mxu0
        %v1276 = vpop.f32.mrf.mxu0
        %v1277 = vadd.f32 0.0, %v1276
        %v1278 = vpop.f32.mrf.mxu0
        %1279 = vmatprep.mubr.bf16.mxu0 0
        %1280 = vmatmul.mubr.bf16.gmra.mxu0 %v1237
        %v1281 = vpop.f32.mrf.mxu0
        %v1282 = vadd.f32 0.0, %v1281
        %v1283 = vpop.f32.mrf.mxu0
        %v1284 = vpop.f32.mrf.mxu0
        %v1285 = vadd.f32 0.0, %v1284
        %v1286 = vpop.f32.mrf.mxu0
        %1287 = vdwg.mxu0
        %v1289 = vsel %vm1122, %v1120, 0
        %v1292 = vsel %vm1122, %v1121, 0
        %1294 = vmatprep.subr.bf16.mxu0 0
        %1295 = vmatpush1.bf16.msra.mxu0 0
        %1296 = vmatprep.subr.bf16.mxu0 0
        %1297 = vmatpush1.bf16.msra.mxu0 0
        %1298 = vmatprep.subr.bf16.mxu0 0
        %1299 = vmatpush1.bf16.msra.mxu0 0
        %1300 = vmatprep.subr.bf16.mxu0 0
        %1301 = vmatpush1.bf16.msra.mxu0 0
        %1302 = vmatprep.subr.bf16.mxu0 0
        %1303 = vmatpush1.bf16.msra.mxu0 0
        %1304 = vmatprep.subr.bf16.mxu0 0
        %1305 = vmatpush1.bf16.msra.mxu0 0
        %1306 = vmatprep.subr.bf16.mxu0 0
        %1307 = vmatpush1.bf16.msra.mxu0 %v901
        %1308 = vmatprep.subr.bf16.mxu0 0
        %1309 = vmatpush1.bf16.msra.mxu0 %v900
        %1310 = vmatprep.subr.bf16.mxu0 0
        %1311 = vmatpush2.bf16.msra.mxu0 0
        %1312 = vmatprep.subr.bf16.mxu0 0
        %1313 = vmatpush2.bf16.msra.mxu0 0
        %1314 = vmatprep.subr.bf16.mxu0 0
        %1315 = vmatpush2.bf16.msra.mxu0 0
        %1316 = vmatprep.subr.bf16.mxu0 0
        %1317 = vmatpush2.bf16.msra.mxu0 0
        %1318 = vmatprep.subr.bf16.mxu0 0
        %1319 = vmatpush2.bf16.msra.mxu0 0
        %1320 = vmatprep.subr.bf16.mxu0 0
        %1321 = vmatpush2.bf16.msra.mxu0 0
        %1322 = vmatprep.subr.bf16.mxu0 0
        %1323 = vmatpush2.bf16.msra.mxu0 0
        %1324 = vmatprep.subr.bf16.mxu0 0
        %1325 = vmatpush2.bf16.msra.mxu0 0
        %1326 = vmatprep.mubr.bf16.mxu0 0
        %1327 = vmatmul.mubr.bf16.gmra.mxu0 %v1289
        %v1328 = vpop.f32.mrf.mxu0
        %v1329 = vadd.f32 0.0, %v1328
        %v1330 = vpop.f32.mrf.mxu0
        %v1331 = vpop.f32.mrf.mxu0
        %v1332 = vadd.f32 0.0, %v1331
        %v1333 = vpop.f32.mrf.mxu0
        %1334 = vmatprep.mubr.bf16.mxu0 0
        %1335 = vmatmul.mubr.bf16.gmra.mxu0 %v1292
        %v1336 = vpop.f32.mrf.mxu0
        %v1337 = vadd.f32 0.0, %v1336
        %v1338 = vpop.f32.mrf.mxu0
        %v1339 = vpop.f32.mrf.mxu0
        %v1340 = vadd.f32 0.0, %v1339
        %v1341 = vpop.f32.mrf.mxu0
        %1342 = vdwg.mxu0
        %v1343 = vld [vmem:[%s2] sm:$0xff]
        %v1344 = vld [vmem:[%s2 + $0x8] sm:$0xff]
        %v1345 = vld [vmem:[%s2 + $0x10] sm:$0xff]
        %v1346 = vld [vmem:[%s2 + $0x18] sm:$0xff]
        %v1347 = vld [vmem:[%s2 + $0x20] sm:$0xff]
        %v1348 = vld [vmem:[%s2 + $0x28] sm:$0xff]
        %v1349 = vld [vmem:[%s2 + $0x30] sm:$0xff]
        %v1350 = vld [vmem:[%s2 + $0x38] sm:$0xff]
        %v1351 = vpack.c.bf16 %v1344, %v1343
        %v1352 = vpack.c.bf16 %v1346, %v1345
        %v1353 = vpack.c.bf16 %v1348, %v1347
        %v1354 = vpack.c.bf16 %v1350, %v1349
        %v1355 = vpack.c.bf16 %v1167, %v1164
        %v1356 = vpack.c.bf16 %v1175, %v1172
        %v1357 = vpack.c.bf16 %v1222, %v1219
        %v1358 = vpack.c.bf16 %v1230, %v1227
        %v1359 = vpack.c.bf16 %v1277, %v1274
        %v1360 = vpack.c.bf16 %v1285, %v1282
        %v1361 = vpack.c.bf16 %v1332, %v1329
        %v1362 = vpack.c.bf16 %v1340, %v1337
        %v1363 = vld [vmem:[%s3] sm:$0xff]
        %v1364 = vld [vmem:[%s3 + $0x8] sm:$0xff]
        %v1365 = vld [vmem:[%s3 + $0x10] sm:$0xff]
        %v1366 = vld [vmem:[%s3 + $0x18] sm:$0xff]
        %v1367 = vld [vmem:[%s3 + $0x20] sm:$0xff]
        %v1368 = vld [vmem:[%s3 + $0x28] sm:$0xff]
        %v1369 = vld [vmem:[%s3 + $0x30] sm:$0xff]
        %v1370 = vld [vmem:[%s3 + $0x38] sm:$0xff]
        %1372 = vset.pattern.permute.xlu0 0
        %1373 = vperm.xlu0 %1372, %v1363
        %v1374 = vpop.permute.xlu0 %1373
        %1377 = vset.pattern.permute.xlu0 0
        %1378 = vperm.xlu0 %1377, %v1364
        %v1379 = vpop.permute.xlu0 %1378
        %1382 = vset.pattern.permute.xlu0 0
        %1383 = vperm.xlu0 %1382, %v1365
        %v1384 = vpop.permute.xlu0 %1383
        %1387 = vset.pattern.permute.xlu0 0
        %1388 = vperm.xlu0 %1387, %v1366
        %v1389 = vpop.permute.xlu0 %1388
        %1392 = vset.pattern.permute.xlu0 0
        %1393 = vperm.xlu0 %1392, %v1367
        %v1394 = vpop.permute.xlu0 %1393
        %1397 = vset.pattern.permute.xlu0 0
        %1398 = vperm.xlu0 %1397, %v1368
        %v1399 = vpop.permute.xlu0 %1398
        %1402 = vset.pattern.permute.xlu0 0
        %1403 = vperm.xlu0 %1402, %v1369
        %v1404 = vpop.permute.xlu0 %1403
        %1407 = vset.pattern.permute.xlu0 0
        %1408 = vperm.xlu0 %1407, %v1370
        %v1409 = vpop.permute.xlu0 %1408
        %1411 = vmatprep.subr.bf16.mxu0 0
        %1412 = vmatpush1.bf16.msra.mxu0 %v1362
        %1413 = vmatprep.subr.bf16.mxu0 0
        %1414 = vmatpush1.bf16.msra.mxu0 %v1361
        %1415 = vmatprep.subr.bf16.mxu0 0
        %1416 = vmatpush1.bf16.msra.mxu0 %v1360
        %1417 = vmatprep.subr.bf16.mxu0 0
        %1418 = vmatpush1.bf16.msra.mxu0 %v1359
        %1419 = vmatprep.subr.bf16.mxu0 0
        %1420 = vmatpush1.bf16.msra.mxu0 %v1358
        %1421 = vmatprep.subr.bf16.mxu0 0
        %1422 = vmatpush1.bf16.msra.mxu0 %v1357
        %1423 = vmatprep.subr.bf16.mxu0 0
        %1424 = vmatpush1.bf16.msra.mxu0 %v1356
        %1425 = vmatprep.subr.bf16.mxu0 0
        %1426 = vmatpush1.bf16.msra.mxu0 %v1355
        %1427 = vmatprep.subr.bf16.mxu0 0
        %1428 = vmatpush2.bf16.msra.mxu0 0
        %1429 = vmatprep.subr.bf16.mxu0 0
        %1430 = vmatpush2.bf16.msra.mxu0 0
        %1431 = vmatprep.subr.bf16.mxu0 0
        %1432 = vmatpush2.bf16.msra.mxu0 0
        %1433 = vmatprep.subr.bf16.mxu0 0
        %1434 = vmatpush2.bf16.msra.mxu0 0
        %1435 = vmatprep.subr.bf16.mxu0 0
        %1436 = vmatpush2.bf16.msra.mxu0 0
        %1437 = vmatprep.subr.bf16.mxu0 0
        %1438 = vmatpush2.bf16.msra.mxu0 0
        %1439 = vmatprep.subr.bf16.mxu0 0
        %1440 = vmatpush2.bf16.msra.mxu0 0
        %1441 = vmatprep.subr.bf16.mxu0 0
        %1442 = vmatpush2.bf16.msra.mxu0 0
        %1443 = vmatprep.mubr.bf16.mxu0 0
        %1444 = vmatmul.mubr.bf16.gmra.mxu0 %v1351
        %v1445 = vpop.f32.mrf.mxu0
        %v1446 = vadd.f32 %v1374, %v1445
        %v1447 = vpop.f32.mrf.mxu0
        %v1448 = vpop.f32.mrf.mxu0
        %v1449 = vadd.f32 %v1379, %v1448
        %v1450 = vpop.f32.mrf.mxu0
        %1451 = vmatprep.mubr.bf16.mxu0 0
        %1452 = vmatmul.mubr.bf16.gmra.mxu0 %v1352
        %v1453 = vpop.f32.mrf.mxu0
        %v1454 = vadd.f32 %v1384, %v1453
        %v1455 = vpop.f32.mrf.mxu0
        %v1456 = vpop.f32.mrf.mxu0
        %v1457 = vadd.f32 %v1389, %v1456
        %v1458 = vpop.f32.mrf.mxu0
        %1459 = vmatprep.mubr.bf16.mxu0 0
        %1460 = vmatmul.mubr.bf16.gmra.mxu0 %v1353
        %v1461 = vpop.f32.mrf.mxu0
        %v1462 = vadd.f32 %v1394, %v1461
        %v1463 = vpop.f32.mrf.mxu0
        %v1464 = vpop.f32.mrf.mxu0
        %v1465 = vadd.f32 %v1399, %v1464
        %v1466 = vpop.f32.mrf.mxu0
        %1467 = vmatprep.mubr.bf16.mxu0 0
        %1468 = vmatmul.mubr.bf16.gmra.mxu0 %v1354
        %v1469 = vpop.f32.mrf.mxu0
        %v1470 = vadd.f32 %v1404, %v1469
        %v1471 = vpop.f32.mrf.mxu0
        %v1472 = vpop.f32.mrf.mxu0
        %v1473 = vadd.f32 %v1409, %v1472
        %v1474 = vpop.f32.mrf.mxu0
        %1475 = vdwg.mxu0
        %v1476 = vmul.f32 %v1446, %v1446
        %v1477 = vmul.f32 %v1449, %v1449
        %v1478 = vmul.f32 %v1454, %v1454
        %v1479 = vmul.f32 %v1457, %v1457
        %v1480 = vmul.f32 %v1462, %v1462
        %v1481 = vmul.f32 %v1465, %v1465
        %v1482 = vmul.f32 %v1470, %v1470
        %v1483 = vmul.f32 %v1473, %v1473
        %v1484 = vadd.f32 %v1476, %v1477
        %v1485 = vadd.f32 %v1484, %v1478
        %v1486 = vadd.f32 %v1485, %v1479
        %v1487 = vadd.f32 %v1486, %v1480
        %v1488 = vadd.f32 %v1487, %v1481
        %v1489 = vadd.f32 %v1488, %v1482
        %v1490 = vadd.f32 %v1489, %v1483
        %v1491 = vrot.slane %v1490, 4
        %v1492 = vadd.f32 %v1490, %v1491
        %v1493 = vrot.slane %v1492, 2
        %v1494 = vadd.f32 %v1492, %v1493
        %v1495 = vrot.slane %v1494, 1
        %v1496 = vadd.f32 %v1494, %v1495
        %v1497 = vrsqrt.pop %v1496
        %v1498 = vmul.f32 %v1496, %v1497
        %vm1499 = vcmp.eq.f32.partialorder %v1496, inf
        %v1500 = vsel %vm1499, %v1496, %v1498
        %vm1501 = vcmp.eq.f32.partialorder %v1496, 0.0
        %v1502 = vand.u32 %v1496, 2147483648
        %v1503 = vsel %vm1501, %v1502, %v1500
        %v1504 = vmax.f32 %v1503, 1e-12
        %v1505 = vrcp.pop %v1504
        %v1506 = vmul.f32 %v1446, %v1505
        %v1507 = vmul.f32 %v1449, %v1505
        %v1508 = vmul.f32 %v1454, %v1505
        %v1509 = vmul.f32 %v1457, %v1505
        %v1510 = vmul.f32 %v1462, %v1505
        %v1511 = vmul.f32 %v1465, %v1505
        %v1512 = vmul.f32 %v1470, %v1505
        %v1513 = vmul.f32 %v1473, %v1505
        %v1514 = vld [vmem:[%s4] sm:$0xff]
        %v1515 = vld [vmem:[%s4 + $0x8] sm:$0xff]
        %v1516 = vld [vmem:[%s4 + $0x10] sm:$0xff]
        %v1517 = vld [vmem:[%s4 + $0x18] sm:$0xff]
        %v1518 = vld [vmem:[%s4 + $0x20] sm:$0xff]
        %v1519 = vld [vmem:[%s4 + $0x28] sm:$0xff]
        %v1520 = vld [vmem:[%s4 + $0x30] sm:$0xff]
        %v1521 = vld [vmem:[%s4 + $0x38] sm:$0xff]
        %1523 = vset.pattern.permute.xlu0 0
        %1524 = vperm.xlu0 %1523, %v1514
        %v1525 = vpop.permute.xlu0 %1524
        %1528 = vset.pattern.permute.xlu0 0
        %1529 = vperm.xlu0 %1528, %v1515
        %v1530 = vpop.permute.xlu0 %1529
        %1533 = vset.pattern.permute.xlu0 0
        %1534 = vperm.xlu0 %1533, %v1516
        %v1535 = vpop.permute.xlu0 %1534
        %1538 = vset.pattern.permute.xlu0 0
        %1539 = vperm.xlu0 %1538, %v1517
        %v1540 = vpop.permute.xlu0 %1539
        %1543 = vset.pattern.permute.xlu0 0
        %1544 = vperm.xlu0 %1543, %v1518
        %v1545 = vpop.permute.xlu0 %1544
        %1548 = vset.pattern.permute.xlu0 0
        %1549 = vperm.xlu0 %1548, %v1519
        %v1550 = vpop.permute.xlu0 %1549
        %1553 = vset.pattern.permute.xlu0 0
        %1554 = vperm.xlu0 %1553, %v1520
        %v1555 = vpop.permute.xlu0 %1554
        %1558 = vset.pattern.permute.xlu0 0
        %1559 = vperm.xlu0 %1558, %v1521
        %v1560 = vpop.permute.xlu0 %1559
        %v1562 = vmul.f32 %v1506, %v1525
        %v1563 = vmul.f32 %v1507, %v1530
        %v1564 = vmul.f32 %v1508, %v1535
        %v1565 = vmul.f32 %v1509, %v1540
        %v1566 = vmul.f32 %v1510, %v1545
        %v1567 = vmul.f32 %v1511, %v1550
        %v1568 = vmul.f32 %v1512, %v1555
        %v1569 = vmul.f32 %v1513, %v1560
        %v1570 = vmul.f32 %v1562, 8.0
        %v1571 = vmul.f32 %v1563, 8.0
        %v1572 = vmul.f32 %v1564, 8.0
        %v1573 = vmul.f32 %v1565, 8.0
        %v1574 = vmul.f32 %v1566, 8.0
        %v1575 = vmul.f32 %v1567, 8.0
        %v1576 = vmul.f32 %v1568, 8.0
        %v1577 = vmul.f32 %v1569, 8.0
        %1578 = vst [vmem:[%s217] sm:$0xff] %v1570
        %1579 = vst [vmem:[%s217 + $0x8] sm:$0xff] %v1571
        %1580 = vst [vmem:[%s217 + $0x10] sm:$0xff] %v1572
        %1581 = vst [vmem:[%s217 + $0x18] sm:$0xff] %v1573
        %1582 = vst [vmem:[%s217 + $0x20] sm:$0xff] %v1574
        %1583 = vst [vmem:[%s217 + $0x28] sm:$0xff] %v1575
        %1584 = vst [vmem:[%s217 + $0x30] sm:$0xff] %v1576
        %1585 = vst [vmem:[%s217 + $0x38] sm:$0xff] %v1577
        %s1586 = sand.u32 %s137, 1
        %s1587 = scalar_lea.sflag [#allocation3], %s1586
        %s1588 = sand.u32 %s137, 1
        %s1589 = smul.addr %s1588, 64
        %s1590 = scalar_lea.vmem [#allocation2], %s1589
        // Predicated region
        $region41: #{linear_attention.1} parent=39 // pred_check
          %p1591 = pneg %p147
        $region42: #{linear_attention.1} parent=39 // pred_check_branch
          %1593 = sbr.rel (%p1591) target = $region44
        $region43: #{linear_attention.1} parent=39 // pred_region
          %s1595 = ssub.s32 1024, 1024
          %1596 = vsyncadd %s1587, %s1595
          %s1597 = smul.addr %s19, 8
          %s1598 = smul.addr %s1597, 128
          %s1599 = scalar_lea.hbm %s5, %s1598
          %s1600 = sshll.u32 %s1590, 4
          %s1601 = int_to_ptr.vmem [resolvable:$true] %s1600
          %1606 = dma.vmem_to_hbm [thread:$0]  %s1601, 1024, %s1599, %s1587, 128, 128, 8
        $region44: #{linear_attention.1} parent=39 // pred_fallthru
          _
      $region40: #{linear_attention.1} parent=5 // pred_fallthru
        _
      %p1607 = scmp.le.s32.totalorder 2, %s14
      // Predicated region
      $region45: #{linear_attention.1} parent=5 // pred_check
        %p1608 = pneg %p1607
      $region46: #{linear_attention.1} parent=5 // pred_check_branch
        %1610 = sbr.rel (%p1608) target = $region48
      $region47: #{linear_attention.1} parent=5 // pred_region
        %s1611 = ssub.s32 %s14, 2
        // Predicated region
        $region49: #{linear_attention.1} parent=47 // pred_check
          %p1612 = pneg %p153
        $region50: #{linear_attention.1} parent=47 // pred_check_branch
          %1614 = sbr.rel (%p1612) target = $region52
        $region51: #{linear_attention.1} parent=47 // pred_region
          %s1615 = sand.u32 %s138, 1
          %s1616 = scalar_lea.sflag [#allocation3], %s1615
          %s1617 = sand.u32 %s138, 1
          %s1618 = smul.addr %s1617, 64
          %s1619 = scalar_lea.vmem [#allocation2], %s1618
          %1620 = dma.done %s1616, 1024
        $region52: #{linear_attention.1} parent=47 // pred_fallthru
          _
      $region48: #{linear_attention.1} parent=5 // pred_fallthru
        _
    $region6: #{linear_attention.1} parent=1 // loop_footer
      %s18 = sadd.s32 1, %s14
    $region7: #{linear_attention.1} parent=1 // loop_footer_branch
      %13 = sbr.rel target = $region3
    $region8: #{linear_attention.1} parent=1 // loop_exit
      _
    %1621 = vsyncpa [#allocation3], 1
    %s1622 = scalar_lea.sflag [#allocation3], 1
    %1623 = vsyncpa %s1622, 1

</llo_original>
